<compile_context>
chip_gen: v5e
topology: v5e:2x2
jax: 0.10.0
libtpu: 0.0.40
codegen_flags: <defaults>
</compile_context>

<pallas_src>
import jax
import jax.numpy as jnp
from jax.experimental import pallas as pl
from jax.experimental.pallas import tpu as pltpu


def _round_up(x, m):
    return (x + m - 1) // m * m


def decoder_kernel(x_ref, w1_ref, b1_ref, w2_ref, b2_ref, out_ref):
    # First linear + ReLU. MXU matmul (possibly bf16 operands), f32 accumulate.
    h = jnp.dot(x_ref[...], w1_ref[...], preferred_element_type=jnp.float32)
    h = jnp.maximum(h + b1_ref[...], 0.0)          # f32 VPU epilogue (v5e-safe)

    # Second linear + sigmoid.
    o = jnp.dot(h.astype(w2_ref.dtype), w2_ref[...],
                preferred_element_type=jnp.float32)
    o = o + b2_ref[...]
    e = jnp.exp(-o)                                # EUP exp
    sig = pl.reciprocal(1.0 + e, approx=True)      # EUP approx reciprocal
    out_ref[...] = sig.astype(out_ref.dtype)


def decoder_forward(x, w1, b1, w2, b2, *, block_rows=512,
                    compute_dtype=jnp.bfloat16):
    """x: [B, latent_dim + n_classes] -> [B, output_dim].

    w1: [in_dim, hidden_dim], w2: [hidden_dim, output_dim] (pre-transposed),
    b1: [hidden_dim], b2: [output_dim].
    """
    B, in_dim = x.shape
    hidden_dim = w1.shape[1]
    output_dim = w2.shape[1]
    assert w1.shape == (in_dim, hidden_dim)
    assert w2.shape == (hidden_dim, output_dim)
    out_dtype = x.dtype

    # Lane-pad feature dims to multiples of 128 (zero padding keeps the math
    # exact for the real columns; padded output columns are sliced away).
    in_p = _round_up(in_dim, 128)
    hid_p = _round_up(hidden_dim, 128)
    out_p = _round_up(output_dim, 128)

    # Batch tile: at least one (8,128)-aligned sublane group, at most block_rows.
    TM = min(block_rows, _round_up(B, 8))
    B_p = _round_up(B, TM)

    f32 = jnp.float32
    x_p = jnp.zeros((B_p, in_p), compute_dtype).at[:B, :in_dim].set(
        x.astype(compute_dtype))
    w1_p = jnp.zeros((in_p, hid_p), compute_dtype).at[:in_dim, :hidden_dim].set(
        w1.astype(compute_dtype))
    b1_p = jnp.zeros((1, hid_p), f32).at[0, :hidden_dim].set(b1.astype(f32))
    w2_p = jnp.zeros((hid_p, out_p), compute_dtype).at[:hidden_dim, :output_dim].set(
        w2.astype(compute_dtype))
    b2_p = jnp.zeros((1, out_p), f32).at[0, :output_dim].set(b2.astype(f32))

    grid = (B_p // TM,)
    out_padded = pl.pallas_call(
        decoder_kernel,
        out_shape=jax.ShapeDtypeStruct((B_p, out_p), out_dtype),
        grid=grid,
        in_specs=[
            pl.BlockSpec((TM, in_p), lambda i: (i, 0)),      # x tile streams
            pl.BlockSpec((in_p, hid_p), lambda i: (0, 0)),   # W1 resident
            pl.BlockSpec((1, hid_p), lambda i: (0, 0)),      # b1 resident
            pl.BlockSpec((hid_p, out_p), lambda i: (0, 0)),  # W2 resident
            pl.BlockSpec((1, out_p), lambda i: (0, 0)),      # b2 resident
        ],
        out_specs=pl.BlockSpec((TM, out_p), lambda i: (i, 0)),
        compiler_params=pltpu.CompilerParams(
            dimension_semantics=("parallel",)),
    )(x_p, w1_p, b1_p, w2_p, b2_p)

    return out_padded[:B, :output_dim]


def init_decoder_params(latent_dim, hidden_dim, output_dim, n_classes, seed=42):
    """Deterministic init mimicking torch.nn.Linear's U(-1/sqrt(fan_in), ...)."""
    in_dim = latent_dim + n_classes
    k1, k2, k3, k4 = jax.random.split(jax.random.PRNGKey(seed), 4)
    bound1 = 1.0 / jnp.sqrt(in_dim)
    bound2 = 1.0 / jnp.sqrt(hidden_dim)
    # Stored pre-transposed: [in, out] so kernel does x @ W.
    w1 = jax.random.uniform(k1, (in_dim, hidden_dim), jnp.float32, -bound1, bound1)
    b1 = jax.random.uniform(k2, (hidden_dim,), jnp.float32, -bound1, bound1)
    w2 = jax.random.uniform(k3, (hidden_dim, output_dim), jnp.float32, -bound2, bound2)
    b2 = jax.random.uniform(k4, (output_dim,), jnp.float32, -bound2, bound2)
    return w1, b1, w2, b2


if __name__ == "__main__":
    # MNIST-style decoder shapes: x = concat(latent, one-hot label).
    B, latent_dim, hidden_dim, output_dim, n_classes = 512, 16, 32, 784, 10
    in_dim = latent_dim + n_classes

    key = jax.random.PRNGKey(0)
    x = jax.random.normal(key, (B, in_dim), jnp.float32)
    w1, b1, w2, b2 = init_decoder_params(latent_dim, hidden_dim, output_dim, n_classes)

    # Reference in plain JAX (f32).
    h_ref = jnp.maximum(x @ w1 + b1, 0.0)
    o_ref = jax.nn.sigmoid(h_ref @ w2 + b2)

    # f32 MXU path, multiple batch tiles (grid=(4,)).
    out_f32 = decoder_forward(x, w1, b1, w2, b2,
                              block_rows=128, compute_dtype=jnp.float32)
    out_f32 = jax.block_until_ready(out_f32)
    assert out_f32.shape == (B, output_dim)
    assert jnp.allclose(out_f32, o_ref, atol=5e-3, rtol=0), "f32 path mismatch"

    # bf16 MXU path (default), f32 accumulation / epilogue.
    out_bf16 = decoder_forward(x, w1, b1, w2, b2, block_rows=256)
    out_bf16 = jax.block_until_ready(out_bf16)
    assert out_bf16.shape == (B, output_dim)
    assert jnp.allclose(out_bf16, o_ref, atol=3e-2, rtol=0), "bf16 path mismatch"

    print("KERNEL_OK")
</pallas_src>

<mosaic_0001>
module attributes {stable_mosaic.version = 11 : i64} {
  func.func @decoder_kernel(%arg0: i32, %arg1: memref<128x128xf32, #tpu.memory_space<vmem>>, %arg2: memref<128x128xf32, #tpu.memory_space<vmem>>, %arg3: memref<1x128xf32, #tpu.memory_space<vmem>>, %arg4: memref<128x896xf32, #tpu.memory_space<vmem>>, %arg5: memref<1x896xf32, #tpu.memory_space<vmem>>, %arg6: memref<128x896xf32, #tpu.memory_space<vmem>>) attributes {dimension_semantics = [#tpu.dimension_semantics<parallel>], iteration_bounds = array<i64: 4>, scalar_prefetch = 0 : i64, scratch_operands = 0 : i64, tpu.core_type = #tpu.core_type<tc>, window_params = [{transform_indices = @transform_0, window_bounds = array<i64: 128, 128>}, {pipeline_mode = #tpu.pipeline_mode<synchronous>, transform_indices = @transform_1, window_bounds = array<i64: 128, 128>}, {pipeline_mode = #tpu.pipeline_mode<synchronous>, transform_indices = @transform_2, window_bounds = array<i64: 1, 128>}, {pipeline_mode = #tpu.pipeline_mode<synchronous>, transform_indices = @transform_3, window_bounds = array<i64: 128, 896>}, {pipeline_mode = #tpu.pipeline_mode<synchronous>, transform_indices = @transform_4, window_bounds = array<i64: 1, 896>}, {transform_indices = @transform_5, window_bounds = array<i64: 128, 896>}]} {
    %c0 = arith.constant 0 : index
    %c0_0 = arith.constant 0 : index
    %0 = vector.load %arg1[%c0, %c0_0] : memref<128x128xf32, #tpu.memory_space<vmem>>, vector<128x128xf32>
    %c0_1 = arith.constant 0 : index
    %c0_2 = arith.constant 0 : index
    %1 = vector.load %arg2[%c0_1, %c0_2] : memref<128x128xf32, #tpu.memory_space<vmem>>, vector<128x128xf32>
    %cst = arith.constant dense<0.000000e+00> : vector<128x128xf32>
    %2 = tpu.matmul %0, %1, %cst {dimension_numbers = #tpu.dot_dimension_numbers<[1], [0], [0], [1], [0, 0, 1, 1], [], []>} : vector<128x128xf32>, vector<128x128xf32>, vector<128x128xf32> -> vector<128x128xf32>
    %c0_3 = arith.constant 0 : index
    %c0_4 = arith.constant 0 : index
    %3 = vector.load %arg3[%c0_3, %c0_4] : memref<1x128xf32, #tpu.memory_space<vmem>>, vector<1x128xf32>
    %4 = vector.broadcast %3 : vector<1x128xf32> to vector<128x128xf32>
    %5 = arith.addf %2, %4 : vector<128x128xf32>
    %cst_5 = arith.constant 0.000000e+00 : f32
    %6 = vector.broadcast %cst_5 : f32 to vector<128x128xf32>
    %7 = arith.maximumf %5, %6 : vector<128x128xf32>
    %c0_6 = arith.constant 0 : index
    %c0_7 = arith.constant 0 : index
    %8 = vector.load %arg4[%c0_6, %c0_7] : memref<128x896xf32, #tpu.memory_space<vmem>>, vector<128x896xf32>
    %cst_8 = arith.constant dense<0.000000e+00> : vector<128x896xf32>
    %9 = tpu.matmul %7, %8, %cst_8 {dimension_numbers = #tpu.dot_dimension_numbers<[1], [0], [0], [1], [0, 0, 1, 1], [], []>} : vector<128x128xf32>, vector<128x896xf32>, vector<128x896xf32> -> vector<128x896xf32>
    %c0_9 = arith.constant 0 : index
    %c0_10 = arith.constant 0 : index
    %10 = vector.load %arg5[%c0_9, %c0_10] : memref<1x896xf32, #tpu.memory_space<vmem>>, vector<1x896xf32>
    %11 = vector.broadcast %10 : vector<1x896xf32> to vector<128x896xf32>
    %12 = arith.addf %9, %11 : vector<128x896xf32>
    %cst_11 = arith.constant 0.000000e+00 : f32
    %13 = vector.broadcast %cst_11 : f32 to vector<128x896xf32>
    %14 = arith.subf %13, %12 : vector<128x896xf32>
    %15 = math.exp %14 : vector<128x896xf32>
    %cst_12 = arith.constant 1.000000e+00 : f32
    %16 = vector.broadcast %cst_12 : f32 to vector<128x896xf32>
    %17 = arith.addf %16, %15 : vector<128x896xf32>
    %18 = tpu.reciprocal %17 {approx = true} : vector<128x896xf32> -> vector<128x896xf32>
    %c0_13 = arith.constant 0 : index
    %c0_14 = arith.constant 0 : index
    %19 = vector.load %arg6[%c0_13, %c0_14] : memref<128x896xf32, #tpu.memory_space<vmem>>, vector<128x896xf32>
    tpu.vector_store %arg6[%c0_13, %c0_14], %18 {strides = array<i32>} : memref<128x896xf32, #tpu.memory_space<vmem>>, vector<128x896xf32>,
    return
  }
  func.func @transform_0(%arg0: i32) -> (i32, i32) {
    %c0_i32 = arith.constant 0 : i32
    %c0_i32_0 = arith.constant 0 : i32
    return %arg0, %c0_i32 : i32, i32
  }
  func.func @transform_1(%arg0: i32) -> (i32, i32) {
    %c0_i32 = arith.constant 0 : i32
    %c0_i32_0 = arith.constant 0 : i32
    %c0_i32_1 = arith.constant 0 : i32
    return %c0_i32, %c0_i32_0 : i32, i32
  }
  func.func @transform_2(%arg0: i32) -> (i32, i32) {
    %c0_i32 = arith.constant 0 : i32
    %c0_i32_0 = arith.constant 0 : i32
    %c0_i32_1 = arith.constant 0 : i32
    return %c0_i32, %c0_i32_0 : i32, i32
  }
  func.func @transform_3(%arg0: i32) -> (i32, i32) {
    %c0_i32 = arith.constant 0 : i32
    %c0_i32_0 = arith.constant 0 : i32
    %c0_i32_1 = arith.constant 0 : i32
    return %c0_i32, %c0_i32_0 : i32, i32
  }
  func.func @transform_4(%arg0: i32) -> (i32, i32) {
    %c0_i32 = arith.constant 0 : i32
    %c0_i32_0 = arith.constant 0 : i32
    %c0_i32_1 = arith.constant 0 : i32
    return %c0_i32, %c0_i32_0 : i32, i32
  }
  func.func @transform_5(%arg0: i32) -> (i32, i32) {
    %c0_i32 = arith.constant 0 : i32
    %c0_i32_0 = arith.constant 0 : i32
    return %arg0, %c0_i32 : i32, i32
  }
}

</mosaic_0001>

<llo_original>
// kernel: tpu_custom_call.1
$region0: #{tpu_custom_call.1}
  #allocation0 [shape = 'u32[]', space=smem, size = 0x4, offset = 0x4, fixed_abs, tag = 'smem constant byte address 0x4 - core index']
  #allocation1 [shape = 'u32[72,128]{1,0:T(1,128)}', space=vmem, size = 0x9000, scoped, tag = 'internal scratch']
  %s0 = inlined_call_operand.hbm [shape: f32[512,128], index: 0, kind: input, shape index: {}]
  %s1 = inlined_call_operand.hbm [shape: f32[128,128], index: 1, kind: input, shape index: {}]
  %s2 = inlined_call_operand.hbm [shape: f32[1,128], index: 2, kind: input, shape index: {}]
  %s3 = inlined_call_operand.hbm [shape: f32[128,896], index: 3, kind: input, shape index: {}]
  %s4 = inlined_call_operand.hbm [shape: f32[1,896], index: 4, kind: input, shape index: {}]
  %s5 = inlined_call_operand.hbm [shape: f32[512,896], index: 5, kind: output, shape index: {}]
  %s6 = sld [smem:[#allocation0]]
  $region73: #{tpu_custom_call.1} parent=0
    _
  %s8 = ssub.s32 1, %s6
  %s9 = scalar_select 0, %s8, %s6
  $region1: #{tpu_custom_call.1} parent=0
    #allocation2 [shape = 'u8[131072]{0}', space=vmem, size = 0x20000, scoped, tag = 'input window, operand 0']
    #allocation3 [shape = 's32[2]{0}', space=sflag, size = 0x8, scoped, tag = 'scoped memory for tpu_custom_call.1']
    #allocation4 [shape = 's32[2]{0}', space=sflag, size = 0x8, scoped, tag = 'scoped memory for tpu_custom_call.1']
    #allocation5 [shape = 'u8[65536]{0}', space=vmem, size = 0x10000, scoped, tag = 'input window, operand 1, single buffered']
    #allocation6 [shape = 's32[1]{0}', space=sflag, size = 0x4, scoped, tag = 'scoped memory for tpu_custom_call.1']
    #allocation7 [shape = 'u8[512]{0}', space=vmem, size = 0x400, scoped, tag = 'input window, operand 2, single buffered']
    #allocation8 [shape = 'u8[458752]{0}', space=vmem, size = 0x70000, scoped, tag = 'input window, operand 3, single buffered']
    #allocation9 [shape = 's32[1]{0}', space=sflag, size = 0x4, scoped, tag = 'scoped memory for tpu_custom_call.1']
    #allocation10 [shape = 'u8[3584]{0}', space=vmem, size = 0x1000, scoped, tag = 'input window, operand 4, single buffered']
    #allocation11 [shape = 'u8[917504]{0}', space=vmem, size = 0xe0000, scoped, tag = 'output window, operand 0']
    %10 = vsyncpa [#allocation3], 0
    %s11 = scalar_lea.sflag [#allocation3], 1
    %12 = vsyncpa %s11, 0
    %13 = vsyncpa [#allocation6], 0
    %14 = vsyncpa [#allocation9], 0
    %15 = vsyncpa [#allocation4], 0
    %s16 = scalar_lea.sflag [#allocation4], 1
    %17 = vsyncpa %s16, 0
    loop: start=0, step=1, limit=6
    $region2: #{tpu_custom_call.1} parent=1 // loop_pre_header
      _
    $region3: #{tpu_custom_call.1} parent=1 // loop_header
      %s19 = sphi 0, %s23
      %p20 = scmp.ge.s32.totalorder %s19, 6
      %s29 = sphi 0, %s31
      %s32 = sphi 0, %s29
      %s33 = sphi 0, %s32
      %s49 = sphi 0, %s33
      %s53 = sphi 0, %s53
      %s55 = sphi 0, %s53
      %s56 = sphi 0, %s55
      %s70 = sphi 0, %s56
      %s74 = sphi 0, %s74
      %s76 = sphi 0, %s74
      %s77 = sphi 0, %s76
      %s91 = sphi 0, %s77
      %s95 = sphi 0, %s95
      %s97 = sphi 0, %s95
      %s98 = sphi 0, %s97
      %s112 = sphi 0, %s98
      %s116 = sphi 0, %s116
      %s118 = sphi 0, %s116
      %s119 = sphi 0, %s118
      %s133 = sphi 0, %s119
      %s139 = sphi 0, %s141
      %s142 = sphi 0, %s139
      %s143 = sphi 0, %s142
      %s159 = sphi 0, %s143
    $region4: #{tpu_custom_call.1} parent=1 // loop_header_branch
      %22 = sbr.rel (%p20) target = $region8
    $region5: #{tpu_custom_call.1} parent=1 // loop_body
      %s24 = ssub.s32 %s19, 1
      %s25 = ssub.s32 %s19, 2
      %s26 = sadd.s32 %s19, 1
      %s27 = ssub.s32 %s19, %s26
      %p28 = scmp.eq.s32.totalorder %s27, 0
      %s30 = sadd.s32 %s29, 1
      %s31 = scalar_select %p28, %s29, %s30
      %p34 = pneg %p28
      %p35 = scmp.eq.s32.totalorder %s19, 3
      %p36 = por %p34, %p35
      %p37 = scmp.ne.s32.totalorder %s29, %s32
      %p38 = scmp.eq.s32.totalorder %s19, 0
      %p39 = por %p37, %p38
      %p40 = scmp.ne.s32.totalorder %s29, %s32
      %p41 = scmp.eq.s32.totalorder %s24, 3
      %p42 = por %p40, %p41
      %p43 = scmp.ne.s32.totalorder %s32, %s33
      %p44 = scmp.eq.s32.totalorder %s24, 0
      %p45 = por %p43, %p44
      %p46 = scmp.ne.s32.totalorder %s32, %s33
      %p47 = scmp.eq.s32.totalorder %s25, 3
      %p48 = por %p46, %p47
      %p50 = scmp.ne.s32.totalorder %s33, %s49
      %p51 = scmp.eq.s32.totalorder %s25, 0
      %p52 = por %p50, %p51
      %s54 = sadd.s32 %s53, 1
      %p57 = scmp.eq.s32.totalorder %s19, 3
      %p58 = scmp.ne.s32.totalorder %s53, %s55
      %p59 = scmp.eq.s32.totalorder %s19, 0
      %p60 = por %p58, %p59
      %p61 = scmp.ne.s32.totalorder %s53, %s55
      %p62 = scmp.eq.s32.totalorder %s24, 3
      %p63 = por %p61, %p62
      %p64 = scmp.ne.s32.totalorder %s55, %s56
      %p65 = scmp.eq.s32.totalorder %s24, 0
      %p66 = por %p64, %p65
      %p67 = scmp.ne.s32.totalorder %s55, %s56
      %p68 = scmp.eq.s32.totalorder %s25, 3
      %p69 = por %p67, %p68
      %p71 = scmp.ne.s32.totalorder %s56, %s70
      %p72 = scmp.eq.s32.totalorder %s25, 0
      %p73 = por %p71, %p72
      %s75 = sadd.s32 %s74, 1
      %p78 = scmp.eq.s32.totalorder %s19, 3
      %p79 = scmp.ne.s32.totalorder %s74, %s76
      %p80 = scmp.eq.s32.totalorder %s19, 0
      %p81 = por %p79, %p80
      %p82 = scmp.ne.s32.totalorder %s74, %s76
      %p83 = scmp.eq.s32.totalorder %s24, 3
      %p84 = por %p82, %p83
      %p85 = scmp.ne.s32.totalorder %s76, %s77
      %p86 = scmp.eq.s32.totalorder %s24, 0
      %p87 = por %p85, %p86
      %p88 = scmp.ne.s32.totalorder %s76, %s77
      %p89 = scmp.eq.s32.totalorder %s25, 3
      %p90 = por %p88, %p89
      %p92 = scmp.ne.s32.totalorder %s77, %s91
      %p93 = scmp.eq.s32.totalorder %s25, 0
      %p94 = por %p92, %p93
      %s96 = sadd.s32 %s95, 1
      %p99 = scmp.eq.s32.totalorder %s19, 3
      %p100 = scmp.ne.s32.totalorder %s95, %s97
      %p101 = scmp.eq.s32.totalorder %s19, 0
      %p102 = por %p100, %p101
      %p103 = scmp.ne.s32.totalorder %s95, %s97
      %p104 = scmp.eq.s32.totalorder %s24, 3
      %p105 = por %p103, %p104
      %p106 = scmp.ne.s32.totalorder %s97, %s98
      %p107 = scmp.eq.s32.totalorder %s24, 0
      %p108 = por %p106, %p107
      %p109 = scmp.ne.s32.totalorder %s97, %s98
      %p110 = scmp.eq.s32.totalorder %s25, 3
      %p111 = por %p109, %p110
      %p113 = scmp.ne.s32.totalorder %s98, %s112
      %p114 = scmp.eq.s32.totalorder %s25, 0
      %p115 = por %p113, %p114
      %s117 = sadd.s32 %s116, 1
      %p120 = scmp.eq.s32.totalorder %s19, 3
      %p121 = scmp.ne.s32.totalorder %s116, %s118
      %p122 = scmp.eq.s32.totalorder %s19, 0
      %p123 = por %p121, %p122
      %p124 = scmp.ne.s32.totalorder %s116, %s118
      %p125 = scmp.eq.s32.totalorder %s24, 3
      %p126 = por %p124, %p125
      %p127 = scmp.ne.s32.totalorder %s118, %s119
      %p128 = scmp.eq.s32.totalorder %s24, 0
      %p129 = por %p127, %p128
      %p130 = scmp.ne.s32.totalorder %s118, %s119
      %p131 = scmp.eq.s32.totalorder %s25, 3
      %p132 = por %p130, %p131
      %p134 = scmp.ne.s32.totalorder %s119, %s133
      %p135 = scmp.eq.s32.totalorder %s25, 0
      %p136 = por %p134, %p135
      %s137 = ssub.s32 %s19, %s26
      %p138 = scmp.eq.s32.totalorder %s137, 0
      %s140 = sadd.s32 %s139, 1
      %s141 = scalar_select %p138, %s139, %s140
      %p144 = pneg %p138
      %p145 = scmp.eq.s32.totalorder %s19, 3
      %p146 = por %p144, %p145
      %p147 = scmp.ne.s32.totalorder %s139, %s142
      %p148 = scmp.eq.s32.totalorder %s19, 0
      %p149 = por %p147, %p148
      %p150 = scmp.ne.s32.totalorder %s139, %s142
      %p151 = scmp.eq.s32.totalorder %s24, 3
      %p152 = por %p150, %p151
      %p153 = scmp.ne.s32.totalorder %s142, %s143
      %p154 = scmp.eq.s32.totalorder %s24, 0
      %p155 = por %p153, %p154
      %p156 = scmp.ne.s32.totalorder %s142, %s143
      %p157 = scmp.eq.s32.totalorder %s25, 3
      %p158 = por %p156, %p157
      %p160 = scmp.ne.s32.totalorder %s143, %s159
      %p161 = scmp.eq.s32.totalorder %s25, 0
      %p162 = por %p160, %p161
      %p163 = scmp.le.s32.totalorder 1, %s19
      %p164 = scmp.lt.s32.totalorder %s19, 5
      %p165 = pnand %p163, %p164
      %p166 = pneg %p165
      // Predicated region
      $region9: #{tpu_custom_call.1} parent=5 // pred_check
        _
      $region10: #{tpu_custom_call.1} parent=5 // pred_check_branch
        %168 = sbr.rel (%p165) target = $region12
      $region11: #{tpu_custom_call.1} parent=5 // pred_region
        %s169 = ssub.s32 %s19, 1
        // Predicated region
        $region13: #{tpu_custom_call.1} parent=11 // pred_check
          %p170 = pneg %p66
        $region14: #{tpu_custom_call.1} parent=11 // pred_check_branch
          %172 = sbr.rel (%p170) target = $region16
        $region15: #{tpu_custom_call.1} parent=11 // pred_region
          %174 = vsyncadd [#allocation6], 0
          %s175 = sshll.u32 %s1, 4
          %s176 = int_to_ptr.hbm [resolvable:$true] %s175
          %s177 = sshll.u32 [#allocation5], 4
          %s178 = int_to_ptr.vmem [resolvable:$true] %s177
          %183 = dma.hbm_to_vmem [thread:$0]  %s176, 2048, %s178, [#allocation6], 128, 128, 8
        $region16: #{tpu_custom_call.1} parent=11 // pred_fallthru
          _
        // Predicated region
        $region17: #{tpu_custom_call.1} parent=11 // pred_check
          %p184 = pneg %p87
        $region18: #{tpu_custom_call.1} parent=11 // pred_check_branch
          %186 = sbr.rel (%p184) target = $region20
        $region19: #{tpu_custom_call.1} parent=11 // pred_region
          %188 = vsyncadd [#allocation6], 0
          %s190 = sshll.u32 %s2, 4
          %s191 = int_to_ptr.hbm [resolvable:$true] %s190
          %s192 = sshll.u32 [#allocation7], 4
          %s193 = int_to_ptr.vmem [resolvable:$true] %s192
          %195 = dma.hbm_to_vmem [thread:$0]  %s191, 16, %s193, [#allocation6]
        $region20: #{tpu_custom_call.1} parent=11 // pred_fallthru
          _
        // Predicated region
        $region21: #{tpu_custom_call.1} parent=11 // pred_check
          %p196 = pneg %p108
        $region22: #{tpu_custom_call.1} parent=11 // pred_check_branch
          %198 = sbr.rel (%p196) target = $region24
        $region23: #{tpu_custom_call.1} parent=11 // pred_region
          %200 = vsyncadd [#allocation9], 0
          %s201 = sshll.u32 %s3, 4
          %s202 = int_to_ptr.hbm [resolvable:$true] %s201
          %s203 = sshll.u32 [#allocation8], 4
          %s204 = int_to_ptr.vmem [resolvable:$true] %s203
          %209 = dma.hbm_to_vmem [thread:$0]  %s202, 14336, %s204, [#allocation9], 896, 896, 56
        $region24: #{tpu_custom_call.1} parent=11 // pred_fallthru
          _
        // Predicated region
        $region25: #{tpu_custom_call.1} parent=11 // pred_check
          %p210 = pneg %p129
        $region26: #{tpu_custom_call.1} parent=11 // pred_check_branch
          %212 = sbr.rel (%p210) target = $region28
        $region27: #{tpu_custom_call.1} parent=11 // pred_region
          %214 = vsyncadd [#allocation9], 0
          %s216 = sshll.u32 %s4, 4
          %s217 = int_to_ptr.hbm [resolvable:$true] %s216
          %s218 = sshll.u32 [#allocation10], 4
          %s219 = int_to_ptr.vmem [resolvable:$true] %s218
          %221 = dma.hbm_to_vmem [thread:$0]  %s217, 112, %s219, [#allocation9]
        $region28: #{tpu_custom_call.1} parent=11 // pred_fallthru
          _
      $region12: #{tpu_custom_call.1} parent=5 // pred_fallthru
        _
      %p222 = scmp.lt.s32.totalorder %s19, 4
      // Predicated region
      $region29: #{tpu_custom_call.1} parent=5 // pred_check
        %p223 = pneg %p222
      $region30: #{tpu_custom_call.1} parent=5 // pred_check_branch
        %225 = sbr.rel (%p223) target = $region32
      $region31: #{tpu_custom_call.1} parent=5 // pred_region
        // Predicated region
        $region33: #{tpu_custom_call.1} parent=31 // pred_check
          %p226 = pneg %p39
        $region34: #{tpu_custom_call.1} parent=31 // pred_check_branch
          %228 = sbr.rel (%p226) target = $region36
        $region35: #{tpu_custom_call.1} parent=31 // pred_region
          %s229 = sand.u32 %s29, 1
          %s230 = scalar_lea.sflag [#allocation3], %s229
          %s231 = sand.u32 %s29, 1
          %s232 = smul.addr %s231, 128
          %s233 = scalar_lea.vmem [#allocation2], %s232
          %s234 = smul.u32 16, %s19
          %236 = vsyncadd %s230, 0
          %s237 = smul.addr %s234, 8
          %s238 = scalar_lea.hbm %s0, %s237
          %s239 = sshll.u32 %s238, 4
          %s240 = int_to_ptr.hbm [resolvable:$true] %s239
          %s241 = sshll.u32 %s233, 4
          %s242 = int_to_ptr.vmem [resolvable:$true] %s241
          %247 = dma.hbm_to_vmem [thread:$0]  %s240, 2048, %s242, %s230, 128, 128, 8
        $region36: #{tpu_custom_call.1} parent=31 // pred_fallthru
          _
      $region32: #{tpu_custom_call.1} parent=5 // pred_fallthru
        _
      %p248 = scmp.le.s32.totalorder 1, %s19
      %p249 = scmp.lt.s32.totalorder %s19, 5
      %p250 = pnand %p248, %p249
      %p251 = pneg %p250
      // Predicated region
      $region37: #{tpu_custom_call.1} parent=5 // pred_check
        _
      $region38: #{tpu_custom_call.1} parent=5 // pred_check_branch
        %253 = sbr.rel (%p250) target = $region40
      $region39: #{tpu_custom_call.1} parent=5 // pred_region
        %s254 = ssub.s32 %s19, 1
        %s255 = sand.u32 %s32, 1
        %s256 = scalar_lea.sflag [#allocation3], %s255
        %s257 = sand.u32 %s32, 1
        %s258 = smul.addr %s257, 128
        %s259 = scalar_lea.vmem [#allocation2], %s258
        // Predicated region
        $region41: #{tpu_custom_call.1} parent=39 // pred_check
          %p260 = pneg %p45
        $region42: #{tpu_custom_call.1} parent=39 // pred_check_branch
          %262 = sbr.rel (%p260) target = $region44
        $region43: #{tpu_custom_call.1} parent=39 // pred_region
          %264 = dma.done %s256, 2048
        $region44: #{tpu_custom_call.1} parent=39 // pred_fallthru
          _
        // Predicated region
        $region45: #{tpu_custom_call.1} parent=39 // pred_check
          %p265 = pneg %p66
        $region46: #{tpu_custom_call.1} parent=39 // pred_check_branch
          %267 = sbr.rel (%p265) target = $region48
        $region47: #{tpu_custom_call.1} parent=39 // pred_region
          %269 = dma.done [#allocation6], 2048
        $region48: #{tpu_custom_call.1} parent=39 // pred_fallthru
          _
        // Predicated region
        $region49: #{tpu_custom_call.1} parent=39 // pred_check
          %p270 = pneg %p87
        $region50: #{tpu_custom_call.1} parent=39 // pred_check_branch
          %272 = sbr.rel (%p270) target = $region52
        $region51: #{tpu_custom_call.1} parent=39 // pred_region
          %274 = dma.done [#allocation6], 16
        $region52: #{tpu_custom_call.1} parent=39 // pred_fallthru
          _
        // Predicated region
        $region53: #{tpu_custom_call.1} parent=39 // pred_check
          %p275 = pneg %p108
        $region54: #{tpu_custom_call.1} parent=39 // pred_check_branch
          %277 = sbr.rel (%p275) target = $region56
        $region55: #{tpu_custom_call.1} parent=39 // pred_region
          %279 = dma.done [#allocation9], 14336
        $region56: #{tpu_custom_call.1} parent=39 // pred_fallthru
          _
        // Predicated region
        $region57: #{tpu_custom_call.1} parent=39 // pred_check
          %p280 = pneg %p129
        $region58: #{tpu_custom_call.1} parent=39 // pred_check_branch
          %282 = sbr.rel (%p280) target = $region60
        $region59: #{tpu_custom_call.1} parent=39 // pred_region
          %284 = dma.done [#allocation9], 112
        $region60: #{tpu_custom_call.1} parent=39 // pred_fallthru
          _
        %s285 = sand.u32 %s32, 1
        %s286 = scalar_lea.sflag [#allocation3], %s285
        %s287 = sand.u32 %s32, 1
        %s288 = smul.addr %s287, 128
        %s289 = scalar_lea.vmem [#allocation2], %s288
        %p290 = pneg %p45
        %p291 = pneg %p42
        %p292 = pneg %p66
        %p293 = pneg %p63
        %p294 = pneg %p87
        %p295 = pneg %p84
        %p296 = pneg %p108
        %p297 = pneg %p105
        %p298 = pneg %p129
        %p299 = pneg %p126
        %p300 = pneg %p155
        %p301 = pneg %p152
        %s302 = sand.u32 %s142, 1
        %s303 = scalar_lea.sflag [#allocation4], %s302
        %s304 = sand.u32 %s142, 1
        %s305 = smul.addr %s304, 896
        %s306 = scalar_lea.vmem [#allocation11], %s305
        %s307 = smul.u32 16, %s24
        %s308 = smul.u32 16, %s24
        %v309 = vld [vmem:[%s259] sm:$0xff]
        %v310 = vld [vmem:[%s259 + $0x8] sm:$0xff]
        %v311 = vld [vmem:[%s259 + $0x10] sm:$0xff]
        %v312 = vld [vmem:[%s259 + $0x18] sm:$0xff]
        %v313 = vld [vmem:[%s259 + $0x20] sm:$0xff]
        %v314 = vld [vmem:[%s259 + $0x28] sm:$0xff]
        %v315 = vld [vmem:[%s259 + $0x30] sm:$0xff]
        %v316 = vld [vmem:[%s259 + $0x38] sm:$0xff]
        %v317 = vld [vmem:[%s259 + $0x40] sm:$0xff]
        %v318 = vld [vmem:[%s259 + $0x48] sm:$0xff]
        %v319 = vld [vmem:[%s259 + $0x50] sm:$0xff]
        %v320 = vld [vmem:[%s259 + $0x58] sm:$0xff]
        %v321 = vld [vmem:[%s259 + $0x60] sm:$0xff]
        %v322 = vld [vmem:[%s259 + $0x68] sm:$0xff]
        %v323 = vld [vmem:[%s259 + $0x70] sm:$0xff]
        %v324 = vld [vmem:[%s259 + $0x78] sm:$0xff]
        %v325 = vld [vmem:[#allocation5] sm:$0xff]
        %v326 = vld [vmem:[#allocation5 + $0x8] sm:$0xff]
        %v327 = vld [vmem:[#allocation5 + $0x10] sm:$0xff]
        %v328 = vld [vmem:[#allocation5 + $0x18] sm:$0xff]
        %v329 = vld [vmem:[#allocation5 + $0x20] sm:$0xff]
        %v330 = vld [vmem:[#allocation5 + $0x28] sm:$0xff]
        %v331 = vld [vmem:[#allocation5 + $0x30] sm:$0xff]
        %v332 = vld [vmem:[#allocation5 + $0x38] sm:$0xff]
        %v333 = vld [vmem:[#allocation5 + $0x40] sm:$0xff]
        %v334 = vld [vmem:[#allocation5 + $0x48] sm:$0xff]
        %v335 = vld [vmem:[#allocation5 + $0x50] sm:$0xff]
        %v336 = vld [vmem:[#allocation5 + $0x58] sm:$0xff]
        %v337 = vld [vmem:[#allocation5 + $0x60] sm:$0xff]
        %v338 = vld [vmem:[#allocation5 + $0x68] sm:$0xff]
        %v339 = vld [vmem:[#allocation5 + $0x70] sm:$0xff]
        %v340 = vld [vmem:[#allocation5 + $0x78] sm:$0xff]
        %v341 = vld [vmem:[#allocation7] sm:$0x1]
        %v343 = vperm.slane %v341, 0
        %345 = vmatpush.msra.mxu0 %v340
        %346 = vmatpush.msra.mxu0 %v339
        %347 = vmatpush.msra.mxu0 %v338
        %348 = vmatpush.msra.mxu0 %v337
        %349 = vmatpush.msra.mxu0 %v336
        %350 = vmatpush.msra.mxu0 %v335
        %351 = vmatpush.msra.mxu0 %v334
        %352 = vmatpush.msra.mxu0 %v333
        %353 = vmatpush.msra.mxu0 %v332
        %354 = vmatpush.msra.mxu0 %v331
        %355 = vmatpush.msra.mxu0 %v330
        %356 = vmatpush.msra.mxu0 %v329
        %357 = vmatpush.msra.mxu0 %v328
        %358 = vmatpush.msra.mxu0 %v327
        %359 = vmatpush.msra.mxu0 %v326
        %360 = vmatpush.msra.mxu0 %v325
        %361 = vmatmul.f32.gmra.mxu0 %v309
        %v362 = vpop.f32.mrf.mxu0
        %v363 = vadd.f32 %v343, %v362
        %364 = vmatmul.f32.gmra.mxu0 %v310
        %v365 = vpop.f32.mrf.mxu0
        %v366 = vadd.f32 %v343, %v365
        %367 = vmatmul.f32.gmra.mxu0 %v311
        %v368 = vpop.f32.mrf.mxu0
        %v369 = vadd.f32 %v343, %v368
        %370 = vmatmul.f32.gmra.mxu0 %v312
        %v371 = vpop.f32.mrf.mxu0
        %v372 = vadd.f32 %v343, %v371
        %373 = vmatmul.f32.gmra.mxu0 %v313
        %v374 = vpop.f32.mrf.mxu0
        %v375 = vadd.f32 %v343, %v374
        %376 = vmatmul.f32.gmra.mxu0 %v314
        %v377 = vpop.f32.mrf.mxu0
        %v378 = vadd.f32 %v343, %v377
        %379 = vmatmul.f32.gmra.mxu0 %v315
        %v380 = vpop.f32.mrf.mxu0
        %v381 = vadd.f32 %v343, %v380
        %382 = vmatmul.f32.gmra.mxu0 %v316
        %v383 = vpop.f32.mrf.mxu0
        %v384 = vadd.f32 %v343, %v383
        %385 = vmatmul.f32.gmra.mxu0 %v317
        %v386 = vpop.f32.mrf.mxu0
        %v387 = vadd.f32 %v343, %v386
        %388 = vmatmul.f32.gmra.mxu0 %v318
        %v389 = vpop.f32.mrf.mxu0
        %v390 = vadd.f32 %v343, %v389
        %391 = vmatmul.f32.gmra.mxu0 %v319
        %v392 = vpop.f32.mrf.mxu0
        %v393 = vadd.f32 %v343, %v392
        %394 = vmatmul.f32.gmra.mxu0 %v320
        %v395 = vpop.f32.mrf.mxu0
        %v396 = vadd.f32 %v343, %v395
        %397 = vmatmul.f32.gmra.mxu0 %v321
        %v398 = vpop.f32.mrf.mxu0
        %v399 = vadd.f32 %v343, %v398
        %400 = vmatmul.f32.gmra.mxu0 %v322
        %v401 = vpop.f32.mrf.mxu0
        %v402 = vadd.f32 %v343, %v401
        %403 = vmatmul.f32.gmra.mxu0 %v323
        %v404 = vpop.f32.mrf.mxu0
        %v405 = vadd.f32 %v343, %v404
        %406 = vmatmul.f32.gmra.mxu0 %v324
        %v407 = vpop.f32.mrf.mxu0
        %v408 = vadd.f32 %v343, %v407
        %409 = vdwg.mxu0
        %v410 = vmax.f32 %v363, 0.0
        %v411 = vmax.f32 %v366, 0.0
        %v412 = vmax.f32 %v369, 0.0
        %v413 = vmax.f32 %v372, 0.0
        %v414 = vmax.f32 %v375, 0.0
        %v415 = vmax.f32 %v378, 0.0
        %v416 = vmax.f32 %v381, 0.0
        %v417 = vmax.f32 %v384, 0.0
        %v418 = vmax.f32 %v387, 0.0
        %v419 = vmax.f32 %v390, 0.0
        %v420 = vmax.f32 %v393, 0.0
        %v421 = vmax.f32 %v396, 0.0
        %v422 = vmax.f32 %v399, 0.0
        %v423 = vmax.f32 %v402, 0.0
        %v424 = vmax.f32 %v405, 0.0
        %v425 = vmax.f32 %v408, 0.0
        %v426 = vld [vmem:[#allocation8] sm:$0xff]
        %v427 = vld [vmem:[#allocation8 + $0x8] sm:$0xff]
        %v428 = vld [vmem:[#allocation8 + $0x10] sm:$0xff]
        %v429 = vld [vmem:[#allocation8 + $0x18] sm:$0xff]
        %v430 = vld [vmem:[#allocation8 + $0x20] sm:$0xff]
        %v431 = vld [vmem:[#allocation8 + $0x28] sm:$0xff]
        %v432 = vld [vmem:[#allocation8 + $0x30] sm:$0xff]
        %v433 = vld [vmem:[#allocation8 + $0x38] sm:$0xff]
        %v434 = vld [vmem:[#allocation8 + $0x40] sm:$0xff]
        %v435 = vld [vmem:[#allocation8 + $0x48] sm:$0xff]
        %v436 = vld [vmem:[#allocation8 + $0x50] sm:$0xff]
        %v437 = vld [vmem:[#allocation8 + $0x58] sm:$0xff]
        %v438 = vld [vmem:[#allocation8 + $0x60] sm:$0xff]
        %v439 = vld [vmem:[#allocation8 + $0x68] sm:$0xff]
        %v440 = vld [vmem:[#allocation8 + $0x70] sm:$0xff]
        %v441 = vld [vmem:[#allocation8 + $0x78] sm:$0xff]
        %v442 = vld [vmem:[#allocation8 + $0x80] sm:$0xff]
        %v443 = vld [vmem:[#allocation8 + $0x88] sm:$0xff]
        %v444 = vld [vmem:[#allocation8 + $0x90] sm:$0xff]
        %v445 = vld [vmem:[#allocation8 + $0x98] sm:$0xff]
        %v446 = vld [vmem:[#allocation8 + $0xa0] sm:$0xff]
        %v447 = vld [vmem:[#allocation8 + $0xa8] sm:$0xff]
        %v448 = vld [vmem:[#allocation8 + $0xb0] sm:$0xff]
        %v449 = vld [vmem:[#allocation8 + $0xb8] sm:$0xff]
        %v450 = vld [vmem:[#allocation8 + $0xc0] sm:$0xff]
        %v451 = vld [vmem:[#allocation8 + $0xc8] sm:$0xff]
        %v452 = vld [vmem:[#allocation8 + $0xd0] sm:$0xff]
        %v453 = vld [vmem:[#allocation8 + $0xd8] sm:$0xff]
        %v454 = vld [vmem:[#allocation8 + $0xe0] sm:$0xff]
        %v455 = vld [vmem:[#allocation8 + $0xe8] sm:$0xff]
        %v456 = vld [vmem:[#allocation8 + $0xf0] sm:$0xff]
        %v457 = vld [vmem:[#allocation8 + $0xf8] sm:$0xff]
        %v458 = vld [vmem:[#allocation8 + $0x100] sm:$0xff]
        %v459 = vld [vmem:[#allocation8 + $0x108] sm:$0xff]
        %v460 = vld [vmem:[#allocation8 + $0x110] sm:$0xff]
        %v461 = vld [vmem:[#allocation8 + $0x118] sm:$0xff]
        %v462 = vld [vmem:[#allocation8 + $0x120] sm:$0xff]
        %v463 = vld [vmem:[#allocation8 + $0x128] sm:$0xff]
        %v464 = vld [vmem:[#allocation8 + $0x130] sm:$0xff]
        %v465 = vld [vmem:[#allocation8 + $0x138] sm:$0xff]
        %v466 = vld [vmem:[#allocation8 + $0x140] sm:$0xff]
        %v467 = vld [vmem:[#allocation8 + $0x148] sm:$0xff]
        %v468 = vld [vmem:[#allocation8 + $0x150] sm:$0xff]
        %v469 = vld [vmem:[#allocation8 + $0x158] sm:$0xff]
        %v470 = vld [vmem:[#allocation8 + $0x160] sm:$0xff]
        %v471 = vld [vmem:[#allocation8 + $0x168] sm:$0xff]
        %v472 = vld [vmem:[#allocation8 + $0x170] sm:$0xff]
        %v473 = vld [vmem:[#allocation8 + $0x178] sm:$0xff]
        %v474 = vld [vmem:[#allocation8 + $0x180] sm:$0xff]
        %v475 = vld [vmem:[#allocation8 + $0x188] sm:$0xff]
        %v476 = vld [vmem:[#allocation8 + $0x190] sm:$0xff]
        %v477 = vld [vmem:[#allocation8 + $0x198] sm:$0xff]
        %v478 = vld [vmem:[#allocation8 + $0x1a0] sm:$0xff]
        %v479 = vld [vmem:[#allocation8 + $0x1a8] sm:$0xff]
        %v480 = vld [vmem:[#allocation8 + $0x1b0] sm:$0xff]
        %v481 = vld [vmem:[#allocation8 + $0x1b8] sm:$0xff]
        %v482 = vld [vmem:[#allocation8 + $0x1c0] sm:$0xff]
        %v483 = vld [vmem:[#allocation8 + $0x1c8] sm:$0xff]
        %v484 = vld [vmem:[#allocation8 + $0x1d0] sm:$0xff]
        %v485 = vld [vmem:[#allocation8 + $0x1d8] sm:$0xff]
        %v486 = vld [vmem:[#allocation8 + $0x1e0] sm:$0xff]
        %v487 = vld [vmem:[#allocation8 + $0x1e8] sm:$0xff]
        %v488 = vld [vmem:[#allocation8 + $0x1f0] sm:$0xff]
        %v489 = vld [vmem:[#allocation8 + $0x1f8] sm:$0xff]
        %v490 = vld [vmem:[#allocation8 + $0x200] sm:$0xff]
        %v491 = vld [vmem:[#allocation8 + $0x208] sm:$0xff]
        %v492 = vld [vmem:[#allocation8 + $0x210] sm:$0xff]
        %v493 = vld [vmem:[#allocation8 + $0x218] sm:$0xff]
        %v494 = vld [vmem:[#allocation8 + $0x220] sm:$0xff]
        %v495 = vld [vmem:[#allocation8 + $0x228] sm:$0xff]
        %v496 = vld [vmem:[#allocation8 + $0x230] sm:$0xff]
        %v497 = vld [vmem:[#allocation8 + $0x238] sm:$0xff]
        %v498 = vld [vmem:[#allocation8 + $0x240] sm:$0xff]
        %v499 = vld [vmem:[#allocation8 + $0x248] sm:$0xff]
        %v500 = vld [vmem:[#allocation8 + $0x250] sm:$0xff]
        %v501 = vld [vmem:[#allocation8 + $0x258] sm:$0xff]
        %v502 = vld [vmem:[#allocation8 + $0x260] sm:$0xff]
        %v503 = vld [vmem:[#allocation8 + $0x268] sm:$0xff]
        %v504 = vld [vmem:[#allocation8 + $0x270] sm:$0xff]
        %v505 = vld [vmem:[#allocation8 + $0x278] sm:$0xff]
        %v506 = vld [vmem:[#allocation8 + $0x280] sm:$0xff]
        %v507 = vld [vmem:[#allocation8 + $0x288] sm:$0xff]
        %v508 = vld [vmem:[#allocation8 + $0x290] sm:$0xff]
        %v509 = vld [vmem:[#allocation8 + $0x298] sm:$0xff]
        %v510 = vld [vmem:[#allocation8 + $0x2a0] sm:$0xff]
        %v511 = vld [vmem:[#allocation8 + $0x2a8] sm:$0xff]
        %v512 = vld [vmem:[#allocation8 + $0x2b0] sm:$0xff]
        %v513 = vld [vmem:[#allocation8 + $0x2b8] sm:$0xff]
        %v514 = vld [vmem:[#allocation8 + $0x2c0] sm:$0xff]
        %v515 = vld [vmem:[#allocation8 + $0x2c8] sm:$0xff]
        %v516 = vld [vmem:[#allocation8 + $0x2d0] sm:$0xff]
        %v517 = vld [vmem:[#allocation8 + $0x2d8] sm:$0xff]
        %v518 = vld [vmem:[#allocation8 + $0x2e0] sm:$0xff]
        %v519 = vld [vmem:[#allocation8 + $0x2e8] sm:$0xff]
        %v520 = vld [vmem:[#allocation8 + $0x2f0] sm:$0xff]
        %v521 = vld [vmem:[#allocation8 + $0x2f8] sm:$0xff]
        %v522 = vld [vmem:[#allocation8 + $0x300] sm:$0xff]
        %v523 = vld [vmem:[#allocation8 + $0x308] sm:$0xff]
        %v524 = vld [vmem:[#allocation8 + $0x310] sm:$0xff]
        %v525 = vld [vmem:[#allocation8 + $0x318] sm:$0xff]
        %v526 = vld [vmem:[#allocation8 + $0x320] sm:$0xff]
        %v527 = vld [vmem:[#allocation8 + $0x328] sm:$0xff]
        %v528 = vld [vmem:[#allocation8 + $0x330] sm:$0xff]
        %v529 = vld [vmem:[#allocation8 + $0x338] sm:$0xff]
        %v530 = vld [vmem:[#allocation8 + $0x340] sm:$0xff]
        %v531 = vld [vmem:[#allocation8 + $0x348] sm:$0xff]
        %v532 = vld [vmem:[#allocation8 + $0x350] sm:$0xff]
        %v533 = vld [vmem:[#allocation8 + $0x358] sm:$0xff]
        %v534 = vld [vmem:[#allocation8 + $0x360] sm:$0xff]
        %v535 = vld [vmem:[#allocation8 + $0x368] sm:$0xff]
        %v536 = vld [vmem:[#allocation8 + $0x370] sm:$0xff]
        %v537 = vld [vmem:[#allocation8 + $0x378] sm:$0xff]
        %v538 = vld [vmem:[#allocation10] sm:$0xff]
        %v540 = vperm.slane %v538, 0
        %v541 = vperm.slane %v538, 1
        %v542 = vperm.slane %v538, 2
        %v543 = vperm.slane %v538, 3
        %v544 = vperm.slane %v538, 4
        %v545 = vperm.slane %v538, 5
        %v546 = vperm.slane %v538, 6
        %554 = vmatpush.msra.mxu0 %v531
        %555 = vmatpush.msra.mxu0 %v524
        %556 = vmatpush.msra.mxu0 %v517
        %557 = vmatpush.msra.mxu0 %v510
        %558 = vmatpush.msra.mxu0 %v503
        %559 = vmatpush.msra.mxu0 %v496
        %560 = vmatpush.msra.mxu0 %v489
        %561 = vmatpush.msra.mxu0 %v482
        %562 = vmatpush.msra.mxu0 %v475
        %563 = vmatpush.msra.mxu0 %v468
        %564 = vmatpush.msra.mxu0 %v461
        %565 = vmatpush.msra.mxu0 %v454
        %566 = vmatpush.msra.mxu0 %v447
        %567 = vmatpush.msra.mxu0 %v440
        %568 = vmatpush.msra.mxu0 %v433
        %569 = vmatpush.msra.mxu0 %v426
        %570 = vmatmul.f32.gmra.mxu0 %v410
        %v571 = vpop.f32.mrf.mxu0
        %v572 = vadd.f32 %v540, %v571
        %573 = vmatmul.f32.gmra.mxu0 %v411
        %v574 = vpop.f32.mrf.mxu0
        %v575 = vadd.f32 %v540, %v574
        %576 = vmatmul.f32.gmra.mxu0 %v412
        %v577 = vpop.f32.mrf.mxu0
        %v578 = vadd.f32 %v540, %v577
        %579 = vmatmul.f32.gmra.mxu0 %v413
        %v580 = vpop.f32.mrf.mxu0
        %v581 = vadd.f32 %v540, %v580
        %582 = vmatmul.f32.gmra.mxu0 %v414
        %v583 = vpop.f32.mrf.mxu0
        %v584 = vadd.f32 %v540, %v583
        %585 = vmatmul.f32.gmra.mxu0 %v415
        %v586 = vpop.f32.mrf.mxu0
        %v587 = vadd.f32 %v540, %v586
        %588 = vmatmul.f32.gmra.mxu0 %v416
        %v589 = vpop.f32.mrf.mxu0
        %v590 = vadd.f32 %v540, %v589
        %591 = vmatmul.f32.gmra.mxu0 %v417
        %v592 = vpop.f32.mrf.mxu0
        %v593 = vadd.f32 %v540, %v592
        %594 = vmatmul.f32.gmra.mxu0 %v418
        %v595 = vpop.f32.mrf.mxu0
        %v596 = vadd.f32 %v540, %v595
        %597 = vmatmul.f32.gmra.mxu0 %v419
        %v598 = vpop.f32.mrf.mxu0
        %v599 = vadd.f32 %v540, %v598
        %600 = vmatmul.f32.gmra.mxu0 %v420
        %v601 = vpop.f32.mrf.mxu0
        %v602 = vadd.f32 %v540, %v601
        %603 = vmatmul.f32.gmra.mxu0 %v421
        %v604 = vpop.f32.mrf.mxu0
        %v605 = vadd.f32 %v540, %v604
        %606 = vmatmul.f32.gmra.mxu0 %v422
        %v607 = vpop.f32.mrf.mxu0
        %v608 = vadd.f32 %v540, %v607
        %609 = vmatmul.f32.gmra.mxu0 %v423
        %v610 = vpop.f32.mrf.mxu0
        %v611 = vadd.f32 %v540, %v610
        %612 = vmatmul.f32.gmra.mxu0 %v424
        %v613 = vpop.f32.mrf.mxu0
        %v614 = vadd.f32 %v540, %v613
        %615 = vmatmul.f32.gmra.mxu0 %v425
        %v616 = vpop.f32.mrf.mxu0
        %v617 = vadd.f32 %v540, %v616
        %618 = vdwg.mxu0
        %619 = vmatpush.msra.mxu0 %v532
        %620 = vmatpush.msra.mxu0 %v525
        %621 = vmatpush.msra.mxu0 %v518
        %622 = vmatpush.msra.mxu0 %v511
        %623 = vmatpush.msra.mxu0 %v504
        %624 = vmatpush.msra.mxu0 %v497
        %625 = vmatpush.msra.mxu0 %v490
        %626 = vmatpush.msra.mxu0 %v483
        %627 = vmatpush.msra.mxu0 %v476
        %628 = vmatpush.msra.mxu0 %v469
        %629 = vmatpush.msra.mxu0 %v462
        %630 = vmatpush.msra.mxu0 %v455
        %631 = vmatpush.msra.mxu0 %v448
        %632 = vmatpush.msra.mxu0 %v441
        %633 = vmatpush.msra.mxu0 %v434
        %634 = vmatpush.msra.mxu0 %v427
        %635 = vmatmul.f32.gmra.mxu0 %v410
        %v636 = vpop.f32.mrf.mxu0
        %v637 = vadd.f32 %v541, %v636
        %638 = vmatmul.f32.gmra.mxu0 %v411
        %v639 = vpop.f32.mrf.mxu0
        %v640 = vadd.f32 %v541, %v639
        %641 = vmatmul.f32.gmra.mxu0 %v412
        %v642 = vpop.f32.mrf.mxu0
        %v643 = vadd.f32 %v541, %v642
        %644 = vmatmul.f32.gmra.mxu0 %v413
        %v645 = vpop.f32.mrf.mxu0
        %v646 = vadd.f32 %v541, %v645
        %647 = vmatmul.f32.gmra.mxu0 %v414
        %v648 = vpop.f32.mrf.mxu0
        %v649 = vadd.f32 %v541, %v648
        %650 = vmatmul.f32.gmra.mxu0 %v415
        %v651 = vpop.f32.mrf.mxu0
        %v652 = vadd.f32 %v541, %v651
        %653 = vmatmul.f32.gmra.mxu0 %v416
        %v654 = vpop.f32.mrf.mxu0
        %v655 = vadd.f32 %v541, %v654
        %656 = vmatmul.f32.gmra.mxu0 %v417
        %v657 = vpop.f32.mrf.mxu0
        %v658 = vadd.f32 %v541, %v657
        %659 = vmatmul.f32.gmra.mxu0 %v418
        %v660 = vpop.f32.mrf.mxu0
        %v661 = vadd.f32 %v541, %v660
        %662 = vmatmul.f32.gmra.mxu0 %v419
        %v663 = vpop.f32.mrf.mxu0
        %v664 = vadd.f32 %v541, %v663
        %665 = vmatmul.f32.gmra.mxu0 %v420
        %v666 = vpop.f32.mrf.mxu0
        %v667 = vadd.f32 %v541, %v666
        %668 = vmatmul.f32.gmra.mxu0 %v421
        %v669 = vpop.f32.mrf.mxu0
        %v670 = vadd.f32 %v541, %v669
        %671 = vmatmul.f32.gmra.mxu0 %v422
        %v672 = vpop.f32.mrf.mxu0
        %v673 = vadd.f32 %v541, %v672
        %674 = vmatmul.f32.gmra.mxu0 %v423
        %v675 = vpop.f32.mrf.mxu0
        %v676 = vadd.f32 %v541, %v675
        %677 = vmatmul.f32.gmra.mxu0 %v424
        %v678 = vpop.f32.mrf.mxu0
        %v679 = vadd.f32 %v541, %v678
        %680 = vmatmul.f32.gmra.mxu0 %v425
        %v681 = vpop.f32.mrf.mxu0
        %v682 = vadd.f32 %v541, %v681
        %683 = vdwg.mxu0
        %684 = vmatpush.msra.mxu0 %v533
        %685 = vmatpush.msra.mxu0 %v526
        %686 = vmatpush.msra.mxu0 %v519
        %687 = vmatpush.msra.mxu0 %v512
        %688 = vmatpush.msra.mxu0 %v505
        %689 = vmatpush.msra.mxu0 %v498
        %690 = vmatpush.msra.mxu0 %v491
        %691 = vmatpush.msra.mxu0 %v484
        %692 = vmatpush.msra.mxu0 %v477
        %693 = vmatpush.msra.mxu0 %v470
        %694 = vmatpush.msra.mxu0 %v463
        %695 = vmatpush.msra.mxu0 %v456
        %696 = vmatpush.msra.mxu0 %v449
        %697 = vmatpush.msra.mxu0 %v442
        %698 = vmatpush.msra.mxu0 %v435
        %699 = vmatpush.msra.mxu0 %v428
        %700 = vmatmul.f32.gmra.mxu0 %v410
        %v701 = vpop.f32.mrf.mxu0
        %v702 = vadd.f32 %v542, %v701
        %703 = vmatmul.f32.gmra.mxu0 %v411
        %v704 = vpop.f32.mrf.mxu0
        %v705 = vadd.f32 %v542, %v704
        %706 = vmatmul.f32.gmra.mxu0 %v412
        %v707 = vpop.f32.mrf.mxu0
        %v708 = vadd.f32 %v542, %v707
        %709 = vmatmul.f32.gmra.mxu0 %v413
        %v710 = vpop.f32.mrf.mxu0
        %v711 = vadd.f32 %v542, %v710
        %712 = vmatmul.f32.gmra.mxu0 %v414
        %v713 = vpop.f32.mrf.mxu0
        %v714 = vadd.f32 %v542, %v713
        %715 = vmatmul.f32.gmra.mxu0 %v415
        %v716 = vpop.f32.mrf.mxu0
        %v717 = vadd.f32 %v542, %v716
        %718 = vmatmul.f32.gmra.mxu0 %v416
        %v719 = vpop.f32.mrf.mxu0
        %v720 = vadd.f32 %v542, %v719
        %721 = vmatmul.f32.gmra.mxu0 %v417
        %v722 = vpop.f32.mrf.mxu0
        %v723 = vadd.f32 %v542, %v722
        %724 = vmatmul.f32.gmra.mxu0 %v418
        %v725 = vpop.f32.mrf.mxu0
        %v726 = vadd.f32 %v542, %v725
        %727 = vmatmul.f32.gmra.mxu0 %v419
        %v728 = vpop.f32.mrf.mxu0
        %v729 = vadd.f32 %v542, %v728
        %730 = vmatmul.f32.gmra.mxu0 %v420
        %v731 = vpop.f32.mrf.mxu0
        %v732 = vadd.f32 %v542, %v731
        %733 = vmatmul.f32.gmra.mxu0 %v421
        %v734 = vpop.f32.mrf.mxu0
        %v735 = vadd.f32 %v542, %v734
        %736 = vmatmul.f32.gmra.mxu0 %v422
        %v737 = vpop.f32.mrf.mxu0
        %v738 = vadd.f32 %v542, %v737
        %739 = vmatmul.f32.gmra.mxu0 %v423
        %v740 = vpop.f32.mrf.mxu0
        %v741 = vadd.f32 %v542, %v740
        %742 = vmatmul.f32.gmra.mxu0 %v424
        %v743 = vpop.f32.mrf.mxu0
        %v744 = vadd.f32 %v542, %v743
        %745 = vmatmul.f32.gmra.mxu0 %v425
        %v746 = vpop.f32.mrf.mxu0
        %v747 = vadd.f32 %v542, %v746
        %748 = vdwg.mxu0
        %749 = vmatpush.msra.mxu0 %v534
        %750 = vmatpush.msra.mxu0 %v527
        %751 = vmatpush.msra.mxu0 %v520
        %752 = vmatpush.msra.mxu0 %v513
        %753 = vmatpush.msra.mxu0 %v506
        %754 = vmatpush.msra.mxu0 %v499
        %755 = vmatpush.msra.mxu0 %v492
        %756 = vmatpush.msra.mxu0 %v485
        %757 = vmatpush.msra.mxu0 %v478
        %758 = vmatpush.msra.mxu0 %v471
        %759 = vmatpush.msra.mxu0 %v464
        %760 = vmatpush.msra.mxu0 %v457
        %761 = vmatpush.msra.mxu0 %v450
        %762 = vmatpush.msra.mxu0 %v443
        %763 = vmatpush.msra.mxu0 %v436
        %764 = vmatpush.msra.mxu0 %v429
        %765 = vmatmul.f32.gmra.mxu0 %v410
        %v766 = vpop.f32.mrf.mxu0
        %v767 = vadd.f32 %v543, %v766
        %768 = vmatmul.f32.gmra.mxu0 %v411
        %v769 = vpop.f32.mrf.mxu0
        %v770 = vadd.f32 %v543, %v769
        %771 = vmatmul.f32.gmra.mxu0 %v412
        %v772 = vpop.f32.mrf.mxu0
        %v773 = vadd.f32 %v543, %v772
        %774 = vmatmul.f32.gmra.mxu0 %v413
        %v775 = vpop.f32.mrf.mxu0
        %v776 = vadd.f32 %v543, %v775
        %777 = vmatmul.f32.gmra.mxu0 %v414
        %v778 = vpop.f32.mrf.mxu0
        %v779 = vadd.f32 %v543, %v778
        %780 = vmatmul.f32.gmra.mxu0 %v415
        %v781 = vpop.f32.mrf.mxu0
        %v782 = vadd.f32 %v543, %v781
        %783 = vmatmul.f32.gmra.mxu0 %v416
        %v784 = vpop.f32.mrf.mxu0
        %v785 = vadd.f32 %v543, %v784
        %786 = vmatmul.f32.gmra.mxu0 %v417
        %v787 = vpop.f32.mrf.mxu0
        %v788 = vadd.f32 %v543, %v787
        %789 = vmatmul.f32.gmra.mxu0 %v418
        %v790 = vpop.f32.mrf.mxu0
        %v791 = vadd.f32 %v543, %v790
        %792 = vmatmul.f32.gmra.mxu0 %v419
        %v793 = vpop.f32.mrf.mxu0
        %v794 = vadd.f32 %v543, %v793
        %795 = vmatmul.f32.gmra.mxu0 %v420
        %v796 = vpop.f32.mrf.mxu0
        %v797 = vadd.f32 %v543, %v796
        %798 = vmatmul.f32.gmra.mxu0 %v421
        %v799 = vpop.f32.mrf.mxu0
        %v800 = vadd.f32 %v543, %v799
        %801 = vmatmul.f32.gmra.mxu0 %v422
        %v802 = vpop.f32.mrf.mxu0
        %v803 = vadd.f32 %v543, %v802
        %804 = vmatmul.f32.gmra.mxu0 %v423
        %v805 = vpop.f32.mrf.mxu0
        %v806 = vadd.f32 %v543, %v805
        %807 = vmatmul.f32.gmra.mxu0 %v424
        %v808 = vpop.f32.mrf.mxu0
        %v809 = vadd.f32 %v543, %v808
        %810 = vmatmul.f32.gmra.mxu0 %v425
        %v811 = vpop.f32.mrf.mxu0
        %v812 = vadd.f32 %v543, %v811
        %813 = vdwg.mxu0
        %814 = vmatpush.msra.mxu0 %v535
        %815 = vmatpush.msra.mxu0 %v528
        %816 = vmatpush.msra.mxu0 %v521
        %817 = vmatpush.msra.mxu0 %v514
        %818 = vmatpush.msra.mxu0 %v507
        %819 = vmatpush.msra.mxu0 %v500
        %820 = vmatpush.msra.mxu0 %v493
        %821 = vmatpush.msra.mxu0 %v486
        %822 = vmatpush.msra.mxu0 %v479
        %823 = vmatpush.msra.mxu0 %v472
        %824 = vmatpush.msra.mxu0 %v465
        %825 = vmatpush.msra.mxu0 %v458
        %826 = vmatpush.msra.mxu0 %v451
        %827 = vmatpush.msra.mxu0 %v444
        %828 = vmatpush.msra.mxu0 %v437
        %829 = vmatpush.msra.mxu0 %v430
        %830 = vmatmul.f32.gmra.mxu0 %v410
        %v831 = vpop.f32.mrf.mxu0
        %v832 = vadd.f32 %v544, %v831
        %833 = vmatmul.f32.gmra.mxu0 %v411
        %v834 = vpop.f32.mrf.mxu0
        %v835 = vadd.f32 %v544, %v834
        %836 = vmatmul.f32.gmra.mxu0 %v412
        %v837 = vpop.f32.mrf.mxu0
        %v838 = vadd.f32 %v544, %v837
        %839 = vmatmul.f32.gmra.mxu0 %v413
        %v840 = vpop.f32.mrf.mxu0
        %v841 = vadd.f32 %v544, %v840
        %842 = vmatmul.f32.gmra.mxu0 %v414
        %v843 = vpop.f32.mrf.mxu0
        %v844 = vadd.f32 %v544, %v843
        %845 = vmatmul.f32.gmra.mxu0 %v415
        %v846 = vpop.f32.mrf.mxu0
        %v847 = vadd.f32 %v544, %v846
        %848 = vmatmul.f32.gmra.mxu0 %v416
        %v849 = vpop.f32.mrf.mxu0
        %v850 = vadd.f32 %v544, %v849
        %851 = vmatmul.f32.gmra.mxu0 %v417
        %v852 = vpop.f32.mrf.mxu0
        %v853 = vadd.f32 %v544, %v852
        %854 = vmatmul.f32.gmra.mxu0 %v418
        %v855 = vpop.f32.mrf.mxu0
        %v856 = vadd.f32 %v544, %v855
        %857 = vmatmul.f32.gmra.mxu0 %v419
        %v858 = vpop.f32.mrf.mxu0
        %v859 = vadd.f32 %v544, %v858
        %860 = vmatmul.f32.gmra.mxu0 %v420
        %v861 = vpop.f32.mrf.mxu0
        %v862 = vadd.f32 %v544, %v861
        %863 = vmatmul.f32.gmra.mxu0 %v421
        %v864 = vpop.f32.mrf.mxu0
        %v865 = vadd.f32 %v544, %v864
        %866 = vmatmul.f32.gmra.mxu0 %v422
        %v867 = vpop.f32.mrf.mxu0
        %v868 = vadd.f32 %v544, %v867
        %869 = vmatmul.f32.gmra.mxu0 %v423
        %v870 = vpop.f32.mrf.mxu0
        %v871 = vadd.f32 %v544, %v870
        %872 = vmatmul.f32.gmra.mxu0 %v424
        %v873 = vpop.f32.mrf.mxu0
        %v874 = vadd.f32 %v544, %v873
        %875 = vmatmul.f32.gmra.mxu0 %v425
        %v876 = vpop.f32.mrf.mxu0
        %v877 = vadd.f32 %v544, %v876
        %878 = vdwg.mxu0
        %879 = vmatpush.msra.mxu0 %v536
        %880 = vmatpush.msra.mxu0 %v529
        %881 = vmatpush.msra.mxu0 %v522
        %882 = vmatpush.msra.mxu0 %v515
        %883 = vmatpush.msra.mxu0 %v508
        %884 = vmatpush.msra.mxu0 %v501
        %885 = vmatpush.msra.mxu0 %v494
        %886 = vmatpush.msra.mxu0 %v487
        %887 = vmatpush.msra.mxu0 %v480
        %888 = vmatpush.msra.mxu0 %v473
        %889 = vmatpush.msra.mxu0 %v466
        %890 = vmatpush.msra.mxu0 %v459
        %891 = vmatpush.msra.mxu0 %v452
        %892 = vmatpush.msra.mxu0 %v445
        %893 = vmatpush.msra.mxu0 %v438
        %894 = vmatpush.msra.mxu0 %v431
        %895 = vmatmul.f32.gmra.mxu0 %v410
        %v896 = vpop.f32.mrf.mxu0
        %v897 = vadd.f32 %v545, %v896
        %898 = vmatmul.f32.gmra.mxu0 %v411
        %v899 = vpop.f32.mrf.mxu0
        %v900 = vadd.f32 %v545, %v899
        %901 = vmatmul.f32.gmra.mxu0 %v412
        %v902 = vpop.f32.mrf.mxu0
        %v903 = vadd.f32 %v545, %v902
        %904 = vmatmul.f32.gmra.mxu0 %v413
        %v905 = vpop.f32.mrf.mxu0
        %v906 = vadd.f32 %v545, %v905
        %907 = vmatmul.f32.gmra.mxu0 %v414
        %v908 = vpop.f32.mrf.mxu0
        %v909 = vadd.f32 %v545, %v908
        %910 = vmatmul.f32.gmra.mxu0 %v415
        %v911 = vpop.f32.mrf.mxu0
        %v912 = vadd.f32 %v545, %v911
        %913 = vmatmul.f32.gmra.mxu0 %v416
        %v914 = vpop.f32.mrf.mxu0
        %v915 = vadd.f32 %v545, %v914
        %916 = vmatmul.f32.gmra.mxu0 %v417
        %v917 = vpop.f32.mrf.mxu0
        %v918 = vadd.f32 %v545, %v917
        %919 = vmatmul.f32.gmra.mxu0 %v418
        %v920 = vpop.f32.mrf.mxu0
        %v921 = vadd.f32 %v545, %v920
        %922 = vmatmul.f32.gmra.mxu0 %v419
        %v923 = vpop.f32.mrf.mxu0
        %v924 = vadd.f32 %v545, %v923
        %925 = vmatmul.f32.gmra.mxu0 %v420
        %v926 = vpop.f32.mrf.mxu0
        %v927 = vadd.f32 %v545, %v926
        %928 = vmatmul.f32.gmra.mxu0 %v421
        %v929 = vpop.f32.mrf.mxu0
        %v930 = vadd.f32 %v545, %v929
        %931 = vmatmul.f32.gmra.mxu0 %v422
        %v932 = vpop.f32.mrf.mxu0
        %v933 = vadd.f32 %v545, %v932
        %934 = vmatmul.f32.gmra.mxu0 %v423
        %v935 = vpop.f32.mrf.mxu0
        %v936 = vadd.f32 %v545, %v935
        %937 = vmatmul.f32.gmra.mxu0 %v424
        %v938 = vpop.f32.mrf.mxu0
        %v939 = vadd.f32 %v545, %v938
        %940 = vmatmul.f32.gmra.mxu0 %v425
        %v941 = vpop.f32.mrf.mxu0
        %v942 = vadd.f32 %v545, %v941
        %943 = vdwg.mxu0
        %944 = vmatpush.msra.mxu0 %v537
        %945 = vmatpush.msra.mxu0 %v530
        %946 = vmatpush.msra.mxu0 %v523
        %947 = vmatpush.msra.mxu0 %v516
        %948 = vmatpush.msra.mxu0 %v509
        %949 = vmatpush.msra.mxu0 %v502
        %950 = vmatpush.msra.mxu0 %v495
        %951 = vmatpush.msra.mxu0 %v488
        %952 = vmatpush.msra.mxu0 %v481
        %953 = vmatpush.msra.mxu0 %v474
        %954 = vmatpush.msra.mxu0 %v467
        %955 = vmatpush.msra.mxu0 %v460
        %956 = vmatpush.msra.mxu0 %v453
        %957 = vmatpush.msra.mxu0 %v446
        %958 = vmatpush.msra.mxu0 %v439
        %959 = vmatpush.msra.mxu0 %v432
        %960 = vmatmul.f32.gmra.mxu0 %v410
        %v961 = vpop.f32.mrf.mxu0
        %v962 = vadd.f32 %v546, %v961
        %963 = vmatmul.f32.gmra.mxu0 %v411
        %v964 = vpop.f32.mrf.mxu0
        %v965 = vadd.f32 %v546, %v964
        %966 = vmatmul.f32.gmra.mxu0 %v412
        %v967 = vpop.f32.mrf.mxu0
        %v968 = vadd.f32 %v546, %v967
        %969 = vmatmul.f32.gmra.mxu0 %v413
        %v970 = vpop.f32.mrf.mxu0
        %v971 = vadd.f32 %v546, %v970
        %972 = vmatmul.f32.gmra.mxu0 %v414
        %v973 = vpop.f32.mrf.mxu0
        %v974 = vadd.f32 %v546, %v973
        %975 = vmatmul.f32.gmra.mxu0 %v415
        %v976 = vpop.f32.mrf.mxu0
        %v977 = vadd.f32 %v546, %v976
        %978 = vmatmul.f32.gmra.mxu0 %v416
        %v979 = vpop.f32.mrf.mxu0
        %v980 = vadd.f32 %v546, %v979
        %981 = vmatmul.f32.gmra.mxu0 %v417
        %v982 = vpop.f32.mrf.mxu0
        %v983 = vadd.f32 %v546, %v982
        %984 = vmatmul.f32.gmra.mxu0 %v418
        %v985 = vpop.f32.mrf.mxu0
        %v986 = vadd.f32 %v546, %v985
        %987 = vmatmul.f32.gmra.mxu0 %v419
        %v988 = vpop.f32.mrf.mxu0
        %v989 = vadd.f32 %v546, %v988
        %990 = vmatmul.f32.gmra.mxu0 %v420
        %v991 = vpop.f32.mrf.mxu0
        %v992 = vadd.f32 %v546, %v991
        %993 = vmatmul.f32.gmra.mxu0 %v421
        %v994 = vpop.f32.mrf.mxu0
        %v995 = vadd.f32 %v546, %v994
        %996 = vmatmul.f32.gmra.mxu0 %v422
        %v997 = vpop.f32.mrf.mxu0
        %v998 = vadd.f32 %v546, %v997
        %999 = vmatmul.f32.gmra.mxu0 %v423
        %v1000 = vpop.f32.mrf.mxu0
        %v1001 = vadd.f32 %v546, %v1000
        %1002 = vmatmul.f32.gmra.mxu0 %v424
        %v1003 = vpop.f32.mrf.mxu0
        %v1004 = vadd.f32 %v546, %v1003
        %1005 = vmatmul.f32.gmra.mxu0 %v425
        %v1006 = vpop.f32.mrf.mxu0
        %v1007 = vadd.f32 %v546, %v1006
        %1008 = vdwg.mxu0
        %v1009 = vsub.f32 0.0, %v572
        %v1010 = vsub.f32 0.0, %v637
        %v1011 = vsub.f32 0.0, %v702
        %v1012 = vsub.f32 0.0, %v767
        %v1013 = vsub.f32 0.0, %v832
        %v1014 = vsub.f32 0.0, %v897
        %v1015 = vsub.f32 0.0, %v962
        %v1016 = vsub.f32 0.0, %v575
        %v1017 = vsub.f32 0.0, %v640
        %v1018 = vsub.f32 0.0, %v705
        %v1019 = vsub.f32 0.0, %v770
        %v1020 = vsub.f32 0.0, %v835
        %v1021 = vsub.f32 0.0, %v900
        %v1022 = vsub.f32 0.0, %v965
        %v1023 = vsub.f32 0.0, %v578
        %v1024 = vsub.f32 0.0, %v643
        %v1025 = vsub.f32 0.0, %v708
        %v1026 = vsub.f32 0.0, %v773
        %v1027 = vsub.f32 0.0, %v838
        %v1028 = vsub.f32 0.0, %v903
        %v1029 = vsub.f32 0.0, %v968
        %v1030 = vsub.f32 0.0, %v581
        %v1031 = vsub.f32 0.0, %v646
        %v1032 = vsub.f32 0.0, %v711
        %v1033 = vsub.f32 0.0, %v776
        %v1034 = vsub.f32 0.0, %v841
        %v1035 = vsub.f32 0.0, %v906
        %v1036 = vsub.f32 0.0, %v971
        %v1037 = vsub.f32 0.0, %v584
        %v1038 = vsub.f32 0.0, %v649
        %v1039 = vsub.f32 0.0, %v714
        %v1040 = vsub.f32 0.0, %v779
        %v1041 = vsub.f32 0.0, %v844
        %v1042 = vsub.f32 0.0, %v909
        %v1043 = vsub.f32 0.0, %v974
        %v1044 = vsub.f32 0.0, %v587
        %v1045 = vsub.f32 0.0, %v652
        %v1046 = vsub.f32 0.0, %v717
        %v1047 = vsub.f32 0.0, %v782
        %v1048 = vsub.f32 0.0, %v847
        %v1049 = vsub.f32 0.0, %v912
        %v1050 = vsub.f32 0.0, %v977
        %v1051 = vsub.f32 0.0, %v590
        %v1052 = vsub.f32 0.0, %v655
        %v1053 = vsub.f32 0.0, %v720
        %v1054 = vsub.f32 0.0, %v785
        %v1055 = vsub.f32 0.0, %v850
        %v1056 = vsub.f32 0.0, %v915
        %v1057 = vsub.f32 0.0, %v980
        %v1058 = vsub.f32 0.0, %v593
        %v1059 = vsub.f32 0.0, %v658
        %v1060 = vsub.f32 0.0, %v723
        %v1061 = vsub.f32 0.0, %v788
        %v1062 = vsub.f32 0.0, %v853
        %v1063 = vsub.f32 0.0, %v918
        %v1064 = vsub.f32 0.0, %v983
        %v1065 = vsub.f32 0.0, %v596
        %v1066 = vsub.f32 0.0, %v661
        %v1067 = vsub.f32 0.0, %v726
        %v1068 = vsub.f32 0.0, %v791
        %v1069 = vsub.f32 0.0, %v856
        %v1070 = vsub.f32 0.0, %v921
        %v1071 = vsub.f32 0.0, %v986
        %v1072 = vsub.f32 0.0, %v599
        %v1073 = vsub.f32 0.0, %v664
        %v1074 = vsub.f32 0.0, %v729
        %v1075 = vsub.f32 0.0, %v794
        %v1076 = vsub.f32 0.0, %v859
        %v1077 = vsub.f32 0.0, %v924
        %v1078 = vsub.f32 0.0, %v989
        %v1079 = vsub.f32 0.0, %v602
        %v1080 = vsub.f32 0.0, %v667
        %v1081 = vsub.f32 0.0, %v732
        %v1082 = vsub.f32 0.0, %v797
        %v1083 = vsub.f32 0.0, %v862
        %v1084 = vsub.f32 0.0, %v927
        %v1085 = vsub.f32 0.0, %v992
        %v1086 = vsub.f32 0.0, %v605
        %v1087 = vsub.f32 0.0, %v670
        %v1088 = vsub.f32 0.0, %v735
        %v1089 = vsub.f32 0.0, %v800
        %v1090 = vsub.f32 0.0, %v865
        %v1091 = vsub.f32 0.0, %v930
        %v1092 = vsub.f32 0.0, %v995
        %v1093 = vsub.f32 0.0, %v608
        %v1094 = vsub.f32 0.0, %v673
        %v1095 = vsub.f32 0.0, %v738
        %v1096 = vsub.f32 0.0, %v803
        %v1097 = vsub.f32 0.0, %v868
        %v1098 = vsub.f32 0.0, %v933
        %v1099 = vsub.f32 0.0, %v998
        %v1100 = vsub.f32 0.0, %v611
        %v1101 = vsub.f32 0.0, %v676
        %v1102 = vsub.f32 0.0, %v741
        %v1103 = vsub.f32 0.0, %v806
        %v1104 = vsub.f32 0.0, %v871
        %v1105 = vsub.f32 0.0, %v936
        %v1106 = vsub.f32 0.0, %v1001
        %v1107 = vsub.f32 0.0, %v614
        %v1108 = vsub.f32 0.0, %v679
        %v1109 = vsub.f32 0.0, %v744
        %v1110 = vsub.f32 0.0, %v809
        %v1111 = vsub.f32 0.0, %v874
        %v1112 = vsub.f32 0.0, %v939
        %v1113 = vsub.f32 0.0, %v1004
        %v1114 = vsub.f32 0.0, %v617
        %v1115 = vsub.f32 0.0, %v682
        %v1116 = vsub.f32 0.0, %v747
        %v1117 = vsub.f32 0.0, %v812
        %v1118 = vsub.f32 0.0, %v877
        %v1119 = vsub.f32 0.0, %v942
        %v1120 = vsub.f32 0.0, %v1007
        %v1121 = vmul.f32 %v1009, 1.442695
        %v1122 = vpow.pop %v1121
        %v1123 = vmul.f32 %v1010, 1.442695
        %v1124 = vpow.pop %v1123
        %v1125 = vmul.f32 %v1011, 1.442695
        %v1126 = vpow.pop %v1125
        %v1127 = vmul.f32 %v1012, 1.442695
        %v1128 = vpow.pop %v1127
        %v1129 = vmul.f32 %v1013, 1.442695
        %v1130 = vpow.pop %v1129
        %v1131 = vmul.f32 %v1014, 1.442695
        %v1132 = vpow.pop %v1131
        %v1133 = vmul.f32 %v1015, 1.442695
        %v1134 = vpow.pop %v1133
        %v1135 = vmul.f32 %v1016, 1.442695
        %v1136 = vpow.pop %v1135
        %v1137 = vmul.f32 %v1017, 1.442695
        %v1138 = vpow.pop %v1137
        %v1139 = vmul.f32 %v1018, 1.442695
        %v1140 = vpow.pop %v1139
        %v1141 = vmul.f32 %v1019, 1.442695
        %v1142 = vpow.pop %v1141
        %v1143 = vmul.f32 %v1020, 1.442695
        %v1144 = vpow.pop %v1143
        %v1145 = vmul.f32 %v1021, 1.442695
        %v1146 = vpow.pop %v1145
        %v1147 = vmul.f32 %v1022, 1.442695
        %v1148 = vpow.pop %v1147
        %v1149 = vmul.f32 %v1023, 1.442695
        %v1150 = vpow.pop %v1149
        %v1151 = vmul.f32 %v1024, 1.442695
        %v1152 = vpow.pop %v1151
        %v1153 = vmul.f32 %v1025, 1.442695
        %v1154 = vpow.pop %v1153
        %v1155 = vmul.f32 %v1026, 1.442695
        %v1156 = vpow.pop %v1155
        %v1157 = vmul.f32 %v1027, 1.442695
        %v1158 = vpow.pop %v1157
        %v1159 = vmul.f32 %v1028, 1.442695
        %v1160 = vpow.pop %v1159
        %v1161 = vmul.f32 %v1029, 1.442695
        %v1162 = vpow.pop %v1161
        %v1163 = vmul.f32 %v1030, 1.442695
        %v1164 = vpow.pop %v1163
        %v1165 = vmul.f32 %v1031, 1.442695
        %v1166 = vpow.pop %v1165
        %v1167 = vmul.f32 %v1032, 1.442695
        %v1168 = vpow.pop %v1167
        %v1169 = vmul.f32 %v1033, 1.442695
        %v1170 = vpow.pop %v1169
        %v1171 = vmul.f32 %v1034, 1.442695
        %v1172 = vpow.pop %v1171
        %v1173 = vmul.f32 %v1035, 1.442695
        %v1174 = vpow.pop %v1173
        %v1175 = vmul.f32 %v1036, 1.442695
        %v1176 = vpow.pop %v1175
        %v1177 = vmul.f32 %v1037, 1.442695
        %v1178 = vpow.pop %v1177
        %v1179 = vmul.f32 %v1038, 1.442695
        %v1180 = vpow.pop %v1179
        %v1181 = vmul.f32 %v1039, 1.442695
        %v1182 = vpow.pop %v1181
        %v1183 = vmul.f32 %v1040, 1.442695
        %v1184 = vpow.pop %v1183
        %v1185 = vmul.f32 %v1041, 1.442695
        %v1186 = vpow.pop %v1185
        %v1187 = vmul.f32 %v1042, 1.442695
        %v1188 = vpow.pop %v1187
        %v1189 = vmul.f32 %v1043, 1.442695
        %v1190 = vpow.pop %v1189
        %v1191 = vmul.f32 %v1044, 1.442695
        %v1192 = vpow.pop %v1191
        %v1193 = vmul.f32 %v1045, 1.442695
        %v1194 = vpow.pop %v1193
        %v1195 = vmul.f32 %v1046, 1.442695
        %v1196 = vpow.pop %v1195
        %v1197 = vmul.f32 %v1047, 1.442695
        %v1198 = vpow.pop %v1197
        %v1199 = vmul.f32 %v1048, 1.442695
        %v1200 = vpow.pop %v1199
        %v1201 = vmul.f32 %v1049, 1.442695
        %v1202 = vpow.pop %v1201
        %v1203 = vmul.f32 %v1050, 1.442695
        %v1204 = vpow.pop %v1203
        %v1205 = vmul.f32 %v1051, 1.442695
        %v1206 = vpow.pop %v1205
        %v1207 = vmul.f32 %v1052, 1.442695
        %v1208 = vpow.pop %v1207
        %v1209 = vmul.f32 %v1053, 1.442695
        %v1210 = vpow.pop %v1209
        %v1211 = vmul.f32 %v1054, 1.442695
        %v1212 = vpow.pop %v1211
        %v1213 = vmul.f32 %v1055, 1.442695
        %v1214 = vpow.pop %v1213
        %v1215 = vmul.f32 %v1056, 1.442695
        %v1216 = vpow.pop %v1215
        %v1217 = vmul.f32 %v1057, 1.442695
        %v1218 = vpow.pop %v1217
        %v1219 = vmul.f32 %v1058, 1.442695
        %v1220 = vpow.pop %v1219
        %v1221 = vmul.f32 %v1059, 1.442695
        %v1222 = vpow.pop %v1221
        %v1223 = vmul.f32 %v1060, 1.442695
        %v1224 = vpow.pop %v1223
        %v1225 = vmul.f32 %v1061, 1.442695
        %v1226 = vpow.pop %v1225
        %v1227 = vmul.f32 %v1062, 1.442695
        %v1228 = vpow.pop %v1227
        %v1229 = vmul.f32 %v1063, 1.442695
        %v1230 = vpow.pop %v1229
        %v1231 = vmul.f32 %v1064, 1.442695
        %v1232 = vpow.pop %v1231
        %v1233 = vmul.f32 %v1065, 1.442695
        %v1234 = vpow.pop %v1233
        %v1235 = vmul.f32 %v1066, 1.442695
        %v1236 = vpow.pop %v1235
        %v1237 = vmul.f32 %v1067, 1.442695
        %v1238 = vpow.pop %v1237
        %v1239 = vmul.f32 %v1068, 1.442695
        %v1240 = vpow.pop %v1239
        %v1241 = vmul.f32 %v1069, 1.442695
        %v1242 = vpow.pop %v1241
        %v1243 = vmul.f32 %v1070, 1.442695
        %v1244 = vpow.pop %v1243
        %v1245 = vmul.f32 %v1071, 1.442695
        %v1246 = vpow.pop %v1245
        %v1247 = vmul.f32 %v1072, 1.442695
        %v1248 = vpow.pop %v1247
        %v1249 = vmul.f32 %v1073, 1.442695
        %v1250 = vpow.pop %v1249
        %v1251 = vmul.f32 %v1074, 1.442695
        %v1252 = vpow.pop %v1251
        %v1253 = vmul.f32 %v1075, 1.442695
        %v1254 = vpow.pop %v1253
        %v1255 = vmul.f32 %v1076, 1.442695
        %v1256 = vpow.pop %v1255
        %v1257 = vmul.f32 %v1077, 1.442695
        %v1258 = vpow.pop %v1257
        %v1259 = vmul.f32 %v1078, 1.442695
        %v1260 = vpow.pop %v1259
        %v1261 = vmul.f32 %v1079, 1.442695
        %v1262 = vpow.pop %v1261
        %v1263 = vmul.f32 %v1080, 1.442695
        %v1264 = vpow.pop %v1263
        %v1265 = vmul.f32 %v1081, 1.442695
        %v1266 = vpow.pop %v1265
        %v1267 = vmul.f32 %v1082, 1.442695
        %v1268 = vpow.pop %v1267
        %v1269 = vmul.f32 %v1083, 1.442695
        %v1270 = vpow.pop %v1269
        %v1271 = vmul.f32 %v1084, 1.442695
        %v1272 = vpow.pop %v1271
        %v1273 = vmul.f32 %v1085, 1.442695
        %v1274 = vpow.pop %v1273
        %v1275 = vmul.f32 %v1086, 1.442695
        %v1276 = vpow.pop %v1275
        %v1277 = vmul.f32 %v1087, 1.442695
        %v1278 = vpow.pop %v1277
        %v1279 = vmul.f32 %v1088, 1.442695
        %v1280 = vpow.pop %v1279
        %v1281 = vmul.f32 %v1089, 1.442695
        %v1282 = vpow.pop %v1281
        %v1283 = vmul.f32 %v1090, 1.442695
        %v1284 = vpow.pop %v1283
        %v1285 = vmul.f32 %v1091, 1.442695
        %v1286 = vpow.pop %v1285
        %v1287 = vmul.f32 %v1092, 1.442695
        %v1288 = vpow.pop %v1287
        %v1289 = vmul.f32 %v1093, 1.442695
        %v1290 = vpow.pop %v1289
        %v1291 = vmul.f32 %v1094, 1.442695
        %v1292 = vpow.pop %v1291
        %v1293 = vmul.f32 %v1095, 1.442695
        %v1294 = vpow.pop %v1293
        %v1295 = vmul.f32 %v1096, 1.442695
        %v1296 = vpow.pop %v1295
        %v1297 = vmul.f32 %v1097, 1.442695
        %v1298 = vpow.pop %v1297
        %v1299 = vmul.f32 %v1098, 1.442695
        %v1300 = vpow.pop %v1299
        %v1301 = vmul.f32 %v1099, 1.442695
        %v1302 = vpow.pop %v1301
        %v1303 = vmul.f32 %v1100, 1.442695
        %v1304 = vpow.pop %v1303
        %v1305 = vmul.f32 %v1101, 1.442695
        %v1306 = vpow.pop %v1305
        %v1307 = vmul.f32 %v1102, 1.442695
        %v1308 = vpow.pop %v1307
        %v1309 = vmul.f32 %v1103, 1.442695
        %v1310 = vpow.pop %v1309
        %v1311 = vmul.f32 %v1104, 1.442695
        %v1312 = vpow.pop %v1311
        %v1313 = vmul.f32 %v1105, 1.442695
        %v1314 = vpow.pop %v1313
        %v1315 = vmul.f32 %v1106, 1.442695
        %v1316 = vpow.pop %v1315
        %v1317 = vmul.f32 %v1107, 1.442695
        %v1318 = vpow.pop %v1317
        %v1319 = vmul.f32 %v1108, 1.442695
        %v1320 = vpow.pop %v1319
        %v1321 = vmul.f32 %v1109, 1.442695
        %v1322 = vpow.pop %v1321
        %v1323 = vmul.f32 %v1110, 1.442695
        %v1324 = vpow.pop %v1323
        %v1325 = vmul.f32 %v1111, 1.442695
        %v1326 = vpow.pop %v1325
        %v1327 = vmul.f32 %v1112, 1.442695
        %v1328 = vpow.pop %v1327
        %v1329 = vmul.f32 %v1113, 1.442695
        %v1330 = vpow.pop %v1329
        %v1331 = vmul.f32 %v1114, 1.442695
        %v1332 = vpow.pop %v1331
        %v1333 = vmul.f32 %v1115, 1.442695
        %v1334 = vpow.pop %v1333
        %v1335 = vmul.f32 %v1116, 1.442695
        %v1336 = vpow.pop %v1335
        %v1337 = vmul.f32 %v1117, 1.442695
        %v1338 = vpow.pop %v1337
        %v1339 = vmul.f32 %v1118, 1.442695
        %v1340 = vpow.pop %v1339
        %v1341 = vmul.f32 %v1119, 1.442695
        %v1342 = vpow.pop %v1341
        %v1343 = vmul.f32 %v1120, 1.442695
        %v1344 = vpow.pop %v1343
        %v1345 = vadd.f32 %v1122, 1.0
        %v1346 = vadd.f32 %v1124, 1.0
        %v1347 = vadd.f32 %v1126, 1.0
        %v1348 = vadd.f32 %v1128, 1.0
        %v1349 = vadd.f32 %v1130, 1.0
        %v1350 = vadd.f32 %v1132, 1.0
        %v1351 = vadd.f32 %v1134, 1.0
        %v1352 = vadd.f32 %v1136, 1.0
        %v1353 = vadd.f32 %v1138, 1.0
        %v1354 = vadd.f32 %v1140, 1.0
        %v1355 = vadd.f32 %v1142, 1.0
        %v1356 = vadd.f32 %v1144, 1.0
        %v1357 = vadd.f32 %v1146, 1.0
        %v1358 = vadd.f32 %v1148, 1.0
        %v1359 = vadd.f32 %v1150, 1.0
        %v1360 = vadd.f32 %v1152, 1.0
        %v1361 = vadd.f32 %v1154, 1.0
        %v1362 = vadd.f32 %v1156, 1.0
        %v1363 = vadd.f32 %v1158, 1.0
        %v1364 = vadd.f32 %v1160, 1.0
        %v1365 = vadd.f32 %v1162, 1.0
        %v1366 = vadd.f32 %v1164, 1.0
        %v1367 = vadd.f32 %v1166, 1.0
        %v1368 = vadd.f32 %v1168, 1.0
        %v1369 = vadd.f32 %v1170, 1.0
        %v1370 = vadd.f32 %v1172, 1.0
        %v1371 = vadd.f32 %v1174, 1.0
        %v1372 = vadd.f32 %v1176, 1.0
        %v1373 = vadd.f32 %v1178, 1.0
        %v1374 = vadd.f32 %v1180, 1.0
        %v1375 = vadd.f32 %v1182, 1.0
        %v1376 = vadd.f32 %v1184, 1.0
        %v1377 = vadd.f32 %v1186, 1.0
        %v1378 = vadd.f32 %v1188, 1.0
        %v1379 = vadd.f32 %v1190, 1.0
        %v1380 = vadd.f32 %v1192, 1.0
        %v1381 = vadd.f32 %v1194, 1.0
        %v1382 = vadd.f32 %v1196, 1.0
        %v1383 = vadd.f32 %v1198, 1.0
        %v1384 = vadd.f32 %v1200, 1.0
        %v1385 = vadd.f32 %v1202, 1.0
        %v1386 = vadd.f32 %v1204, 1.0
        %v1387 = vadd.f32 %v1206, 1.0
        %v1388 = vadd.f32 %v1208, 1.0
        %v1389 = vadd.f32 %v1210, 1.0
        %v1390 = vadd.f32 %v1212, 1.0
        %v1391 = vadd.f32 %v1214, 1.0
        %v1392 = vadd.f32 %v1216, 1.0
        %v1393 = vadd.f32 %v1218, 1.0
        %v1394 = vadd.f32 %v1220, 1.0
        %v1395 = vadd.f32 %v1222, 1.0
        %v1396 = vadd.f32 %v1224, 1.0
        %v1397 = vadd.f32 %v1226, 1.0
        %v1398 = vadd.f32 %v1228, 1.0
        %v1399 = vadd.f32 %v1230, 1.0
        %v1400 = vadd.f32 %v1232, 1.0
        %v1401 = vadd.f32 %v1234, 1.0
        %v1402 = vadd.f32 %v1236, 1.0
        %v1403 = vadd.f32 %v1238, 1.0
        %v1404 = vadd.f32 %v1240, 1.0
        %v1405 = vadd.f32 %v1242, 1.0
        %v1406 = vadd.f32 %v1244, 1.0
        %v1407 = vadd.f32 %v1246, 1.0
        %v1408 = vadd.f32 %v1248, 1.0
        %v1409 = vadd.f32 %v1250, 1.0
        %v1410 = vadd.f32 %v1252, 1.0
        %v1411 = vadd.f32 %v1254, 1.0
        %v1412 = vadd.f32 %v1256, 1.0
        %v1413 = vadd.f32 %v1258, 1.0
        %v1414 = vadd.f32 %v1260, 1.0
        %v1415 = vadd.f32 %v1262, 1.0
        %v1416 = vadd.f32 %v1264, 1.0
        %v1417 = vadd.f32 %v1266, 1.0
        %v1418 = vadd.f32 %v1268, 1.0
        %v1419 = vadd.f32 %v1270, 1.0
        %v1420 = vadd.f32 %v1272, 1.0
        %v1421 = vadd.f32 %v1274, 1.0
        %v1422 = vadd.f32 %v1276, 1.0
        %v1423 = vadd.f32 %v1278, 1.0
        %v1424 = vadd.f32 %v1280, 1.0
        %v1425 = vadd.f32 %v1282, 1.0
        %v1426 = vadd.f32 %v1284, 1.0
        %v1427 = vadd.f32 %v1286, 1.0
        %v1428 = vadd.f32 %v1288, 1.0
        %v1429 = vadd.f32 %v1290, 1.0
        %v1430 = vadd.f32 %v1292, 1.0
        %v1431 = vadd.f32 %v1294, 1.0
        %v1432 = vadd.f32 %v1296, 1.0
        %v1433 = vadd.f32 %v1298, 1.0
        %v1434 = vadd.f32 %v1300, 1.0
        %v1435 = vadd.f32 %v1302, 1.0
        %v1436 = vadd.f32 %v1304, 1.0
        %v1437 = vadd.f32 %v1306, 1.0
        %v1438 = vadd.f32 %v1308, 1.0
        %v1439 = vadd.f32 %v1310, 1.0
        %v1440 = vadd.f32 %v1312, 1.0
        %v1441 = vadd.f32 %v1314, 1.0
        %v1442 = vadd.f32 %v1316, 1.0
        %v1443 = vadd.f32 %v1318, 1.0
        %v1444 = vadd.f32 %v1320, 1.0
        %v1445 = vadd.f32 %v1322, 1.0
        %v1446 = vadd.f32 %v1324, 1.0
        %v1447 = vadd.f32 %v1326, 1.0
        %v1448 = vadd.f32 %v1328, 1.0
        %v1449 = vadd.f32 %v1330, 1.0
        %v1450 = vadd.f32 %v1332, 1.0
        %v1451 = vadd.f32 %v1334, 1.0
        %v1452 = vadd.f32 %v1336, 1.0
        %v1453 = vadd.f32 %v1338, 1.0
        %v1454 = vadd.f32 %v1340, 1.0
        %v1455 = vadd.f32 %v1342, 1.0
        %v1456 = vadd.f32 %v1344, 1.0
        %v1457 = vrcp.pop %v1345
        %v1458 = vrcp.pop %v1346
        %v1459 = vrcp.pop %v1347
        %v1460 = vrcp.pop %v1348
        %v1461 = vrcp.pop %v1349
        %v1462 = vrcp.pop %v1350
        %v1463 = vrcp.pop %v1351
        %v1464 = vrcp.pop %v1352
        %v1465 = vrcp.pop %v1353
        %v1466 = vrcp.pop %v1354
        %v1467 = vrcp.pop %v1355
        %v1468 = vrcp.pop %v1356
        %v1469 = vrcp.pop %v1357
        %v1470 = vrcp.pop %v1358
        %v1471 = vrcp.pop %v1359
        %v1472 = vrcp.pop %v1360
        %v1473 = vrcp.pop %v1361
        %v1474 = vrcp.pop %v1362
        %v1475 = vrcp.pop %v1363
        %v1476 = vrcp.pop %v1364
        %v1477 = vrcp.pop %v1365
        %v1478 = vrcp.pop %v1366
        %v1479 = vrcp.pop %v1367
        %v1480 = vrcp.pop %v1368
        %v1481 = vrcp.pop %v1369
        %v1482 = vrcp.pop %v1370
        %v1483 = vrcp.pop %v1371
        %v1484 = vrcp.pop %v1372
        %v1485 = vrcp.pop %v1373
        %v1486 = vrcp.pop %v1374
        %v1487 = vrcp.pop %v1375
        %v1488 = vrcp.pop %v1376
        %v1489 = vrcp.pop %v1377
        %v1490 = vrcp.pop %v1378
        %v1491 = vrcp.pop %v1379
        %v1492 = vrcp.pop %v1380
        %v1493 = vrcp.pop %v1381
        %v1494 = vrcp.pop %v1382
        %v1495 = vrcp.pop %v1383
        %v1496 = vrcp.pop %v1384
        %v1497 = vrcp.pop %v1385
        %v1498 = vrcp.pop %v1386
        %v1499 = vrcp.pop %v1387
        %v1500 = vrcp.pop %v1388
        %v1501 = vrcp.pop %v1389
        %v1502 = vrcp.pop %v1390
        %v1503 = vrcp.pop %v1391
        %v1504 = vrcp.pop %v1392
        %v1505 = vrcp.pop %v1393
        %v1506 = vrcp.pop %v1394
        %v1507 = vrcp.pop %v1395
        %v1508 = vrcp.pop %v1396
        %v1509 = vrcp.pop %v1397
        %v1510 = vrcp.pop %v1398
        %v1511 = vrcp.pop %v1399
        %v1512 = vrcp.pop %v1400
        %v1513 = vrcp.pop %v1401
        %v1514 = vrcp.pop %v1402
        %v1515 = vrcp.pop %v1403
        %v1516 = vrcp.pop %v1404
        %v1517 = vrcp.pop %v1405
        %v1518 = vrcp.pop %v1406
        %v1519 = vrcp.pop %v1407
        %v1520 = vrcp.pop %v1408
        %v1521 = vrcp.pop %v1409
        %v1522 = vrcp.pop %v1410
        %v1523 = vrcp.pop %v1411
        %v1524 = vrcp.pop %v1412
        %v1525 = vrcp.pop %v1413
        %v1526 = vrcp.pop %v1414
        %v1527 = vrcp.pop %v1415
        %v1528 = vrcp.pop %v1416
        %v1529 = vrcp.pop %v1417
        %v1530 = vrcp.pop %v1418
        %v1531 = vrcp.pop %v1419
        %v1532 = vrcp.pop %v1420
        %v1533 = vrcp.pop %v1421
        %v1534 = vrcp.pop %v1422
        %v1535 = vrcp.pop %v1423
        %v1536 = vrcp.pop %v1424
        %v1537 = vrcp.pop %v1425
        %v1538 = vrcp.pop %v1426
        %v1539 = vrcp.pop %v1427
        %v1540 = vrcp.pop %v1428
        %v1541 = vrcp.pop %v1429
        %v1542 = vrcp.pop %v1430
        %v1543 = vrcp.pop %v1431
        %v1544 = vrcp.pop %v1432
        %v1545 = vrcp.pop %v1433
        %v1546 = vrcp.pop %v1434
        %v1547 = vrcp.pop %v1435
        %v1548 = vrcp.pop %v1436
        %v1549 = vrcp.pop %v1437
        %v1550 = vrcp.pop %v1438
        %v1551 = vrcp.pop %v1439
        %v1552 = vrcp.pop %v1440
        %v1553 = vrcp.pop %v1441
        %v1554 = vrcp.pop %v1442
        %v1555 = vrcp.pop %v1443
        %v1556 = vrcp.pop %v1444
        %v1557 = vrcp.pop %v1445
        %v1558 = vrcp.pop %v1446
        %v1559 = vrcp.pop %v1447
        %v1560 = vrcp.pop %v1448
        %v1561 = vrcp.pop %v1449
        %v1562 = vrcp.pop %v1450
        %v1563 = vrcp.pop %v1451
        %v1564 = vrcp.pop %v1452
        %v1565 = vrcp.pop %v1453
        %v1566 = vrcp.pop %v1454
        %v1567 = vrcp.pop %v1455
        %v1568 = vrcp.pop %v1456
        %1569 = vst [vmem:[%s306] sm:$0xff] %v1457
        %1570 = vst [vmem:[%s306 + $0x8] sm:$0xff] %v1458
        %1571 = vst [vmem:[%s306 + $0x10] sm:$0xff] %v1459
        %1572 = vst [vmem:[%s306 + $0x18] sm:$0xff] %v1460
        %1573 = vst [vmem:[%s306 + $0x20] sm:$0xff] %v1461
        %1574 = vst [vmem:[%s306 + $0x28] sm:$0xff] %v1462
        %1575 = vst [vmem:[%s306 + $0x30] sm:$0xff] %v1463
        %1576 = vst [vmem:[%s306 + $0x38] sm:$0xff] %v1464
        %1577 = vst [vmem:[%s306 + $0x40] sm:$0xff] %v1465
        %1578 = vst [vmem:[%s306 + $0x48] sm:$0xff] %v1466
        %1579 = vst [vmem:[%s306 + $0x50] sm:$0xff] %v1467
        %1580 = vst [vmem:[%s306 + $0x58] sm:$0xff] %v1468
        %1581 = vst [vmem:[%s306 + $0x60] sm:$0xff] %v1469
        %1582 = vst [vmem:[%s306 + $0x68] sm:$0xff] %v1470
        %1583 = vst [vmem:[%s306 + $0x70] sm:$0xff] %v1471
        %1584 = vst [vmem:[%s306 + $0x78] sm:$0xff] %v1472
        %1585 = vst [vmem:[%s306 + $0x80] sm:$0xff] %v1473
        %1586 = vst [vmem:[%s306 + $0x88] sm:$0xff] %v1474
        %1587 = vst [vmem:[%s306 + $0x90] sm:$0xff] %v1475
        %1588 = vst [vmem:[%s306 + $0x98] sm:$0xff] %v1476
        %1589 = vst [vmem:[%s306 + $0xa0] sm:$0xff] %v1477
        %1590 = vst [vmem:[%s306 + $0xa8] sm:$0xff] %v1478
        %1591 = vst [vmem:[%s306 + $0xb0] sm:$0xff] %v1479
        %1592 = vst [vmem:[%s306 + $0xb8] sm:$0xff] %v1480
        %1593 = vst [vmem:[%s306 + $0xc0] sm:$0xff] %v1481
        %1594 = vst [vmem:[%s306 + $0xc8] sm:$0xff] %v1482
        %1595 = vst [vmem:[%s306 + $0xd0] sm:$0xff] %v1483
        %1596 = vst [vmem:[%s306 + $0xd8] sm:$0xff] %v1484
        %1597 = vst [vmem:[%s306 + $0xe0] sm:$0xff] %v1485
        %1598 = vst [vmem:[%s306 + $0xe8] sm:$0xff] %v1486
        %1599 = vst [vmem:[%s306 + $0xf0] sm:$0xff] %v1487
        %1600 = vst [vmem:[%s306 + $0xf8] sm:$0xff] %v1488
        %1601 = vst [vmem:[%s306 + $0x100] sm:$0xff] %v1489
        %1602 = vst [vmem:[%s306 + $0x108] sm:$0xff] %v1490
        %1603 = vst [vmem:[%s306 + $0x110] sm:$0xff] %v1491
        %1604 = vst [vmem:[%s306 + $0x118] sm:$0xff] %v1492
        %1605 = vst [vmem:[%s306 + $0x120] sm:$0xff] %v1493
        %1606 = vst [vmem:[%s306 + $0x128] sm:$0xff] %v1494
        %1607 = vst [vmem:[%s306 + $0x130] sm:$0xff] %v1495
        %1608 = vst [vmem:[%s306 + $0x138] sm:$0xff] %v1496
        %1609 = vst [vmem:[%s306 + $0x140] sm:$0xff] %v1497
        %1610 = vst [vmem:[%s306 + $0x148] sm:$0xff] %v1498
        %1611 = vst [vmem:[%s306 + $0x150] sm:$0xff] %v1499
        %1612 = vst [vmem:[%s306 + $0x158] sm:$0xff] %v1500
        %1613 = vst [vmem:[%s306 + $0x160] sm:$0xff] %v1501
        %1614 = vst [vmem:[%s306 + $0x168] sm:$0xff] %v1502
        %1615 = vst [vmem:[%s306 + $0x170] sm:$0xff] %v1503
        %1616 = vst [vmem:[%s306 + $0x178] sm:$0xff] %v1504
        %1617 = vst [vmem:[%s306 + $0x180] sm:$0xff] %v1505
        %1618 = vst [vmem:[%s306 + $0x188] sm:$0xff] %v1506
        %1619 = vst [vmem:[%s306 + $0x190] sm:$0xff] %v1507
        %1620 = vst [vmem:[%s306 + $0x198] sm:$0xff] %v1508
        %1621 = vst [vmem:[%s306 + $0x1a0] sm:$0xff] %v1509
        %1622 = vst [vmem:[%s306 + $0x1a8] sm:$0xff] %v1510
        %1623 = vst [vmem:[%s306 + $0x1b0] sm:$0xff] %v1511
        %1624 = vst [vmem:[%s306 + $0x1b8] sm:$0xff] %v1512
        %1625 = vst [vmem:[%s306 + $0x1c0] sm:$0xff] %v1513
        %1626 = vst [vmem:[%s306 + $0x1c8] sm:$0xff] %v1514
        %1627 = vst [vmem:[%s306 + $0x1d0] sm:$0xff] %v1515
        %1628 = vst [vmem:[%s306 + $0x1d8] sm:$0xff] %v1516
        %1629 = vst [vmem:[%s306 + $0x1e0] sm:$0xff] %v1517
        %1630 = vst [vmem:[%s306 + $0x1e8] sm:$0xff] %v1518
        %1631 = vst [vmem:[%s306 + $0x1f0] sm:$0xff] %v1519
        %1632 = vst [vmem:[%s306 + $0x1f8] sm:$0xff] %v1520
        %1633 = vst [vmem:[%s306 + $0x200] sm:$0xff] %v1521
        %1634 = vst [vmem:[%s306 + $0x208] sm:$0xff] %v1522
        %1635 = vst [vmem:[%s306 + $0x210] sm:$0xff] %v1523
        %1636 = vst [vmem:[%s306 + $0x218] sm:$0xff] %v1524
        %1637 = vst [vmem:[%s306 + $0x220] sm:$0xff] %v1525
        %1638 = vst [vmem:[%s306 + $0x228] sm:$0xff] %v1526
        %1639 = vst [vmem:[%s306 + $0x230] sm:$0xff] %v1527
        %1640 = vst [vmem:[%s306 + $0x238] sm:$0xff] %v1528
        %1641 = vst [vmem:[%s306 + $0x240] sm:$0xff] %v1529
        %1642 = vst [vmem:[%s306 + $0x248] sm:$0xff] %v1530
        %1643 = vst [vmem:[%s306 + $0x250] sm:$0xff] %v1531
        %1644 = vst [vmem:[%s306 + $0x258] sm:$0xff] %v1532
        %1645 = vst [vmem:[%s306 + $0x260] sm:$0xff] %v1533
        %1646 = vst [vmem:[%s306 + $0x268] sm:$0xff] %v1534
        %1647 = vst [vmem:[%s306 + $0x270] sm:$0xff] %v1535
        %1648 = vst [vmem:[%s306 + $0x278] sm:$0xff] %v1536
        %1649 = vst [vmem:[%s306 + $0x280] sm:$0xff] %v1537
        %1650 = vst [vmem:[%s306 + $0x288] sm:$0xff] %v1538
        %1651 = vst [vmem:[%s306 + $0x290] sm:$0xff] %v1539
        %1652 = vst [vmem:[%s306 + $0x298] sm:$0xff] %v1540
        %1653 = vst [vmem:[%s306 + $0x2a0] sm:$0xff] %v1541
        %1654 = vst [vmem:[%s306 + $0x2a8] sm:$0xff] %v1542
        %1655 = vst [vmem:[%s306 + $0x2b0] sm:$0xff] %v1543
        %1656 = vst [vmem:[%s306 + $0x2b8] sm:$0xff] %v1544
        %1657 = vst [vmem:[%s306 + $0x2c0] sm:$0xff] %v1545
        %1658 = vst [vmem:[%s306 + $0x2c8] sm:$0xff] %v1546
        %1659 = vst [vmem:[%s306 + $0x2d0] sm:$0xff] %v1547
        %1660 = vst [vmem:[%s306 + $0x2d8] sm:$0xff] %v1548
        %1661 = vst [vmem:[%s306 + $0x2e0] sm:$0xff] %v1549
        %1662 = vst [vmem:[%s306 + $0x2e8] sm:$0xff] %v1550
        %1663 = vst [vmem:[%s306 + $0x2f0] sm:$0xff] %v1551
        %1664 = vst [vmem:[%s306 + $0x2f8] sm:$0xff] %v1552
        %1665 = vst [vmem:[%s306 + $0x300] sm:$0xff] %v1553
        %1666 = vst [vmem:[%s306 + $0x308] sm:$0xff] %v1554
        %1667 = vst [vmem:[%s306 + $0x310] sm:$0xff] %v1555
        %1668 = vst [vmem:[%s306 + $0x318] sm:$0xff] %v1556
        %1669 = vst [vmem:[%s306 + $0x320] sm:$0xff] %v1557
        %1670 = vst [vmem:[%s306 + $0x328] sm:$0xff] %v1558
        %1671 = vst [vmem:[%s306 + $0x330] sm:$0xff] %v1559
        %1672 = vst [vmem:[%s306 + $0x338] sm:$0xff] %v1560
        %1673 = vst [vmem:[%s306 + $0x340] sm:$0xff] %v1561
        %1674 = vst [vmem:[%s306 + $0x348] sm:$0xff] %v1562
        %1675 = vst [vmem:[%s306 + $0x350] sm:$0xff] %v1563
        %1676 = vst [vmem:[%s306 + $0x358] sm:$0xff] %v1564
        %1677 = vst [vmem:[%s306 + $0x360] sm:$0xff] %v1565
        %1678 = vst [vmem:[%s306 + $0x368] sm:$0xff] %v1566
        %1679 = vst [vmem:[%s306 + $0x370] sm:$0xff] %v1567
        %1680 = vst [vmem:[%s306 + $0x378] sm:$0xff] %v1568
        %s1681 = sand.u32 %s142, 1
        %s1682 = scalar_lea.sflag [#allocation4], %s1681
        %s1683 = sand.u32 %s142, 1
        %s1684 = smul.addr %s1683, 896
        %s1685 = scalar_lea.vmem [#allocation11], %s1684
        // Predicated region
        $region61: #{tpu_custom_call.1} parent=39 // pred_check
          %p1686 = pneg %p152
        $region62: #{tpu_custom_call.1} parent=39 // pred_check_branch
          %1688 = sbr.rel (%p1686) target = $region64
        $region63: #{tpu_custom_call.1} parent=39 // pred_region
          %s1689 = smul.u32 16, %s24
          %1691 = vsyncadd %s1682, 0
          %s1692 = smul.addr %s1689, 7
          %s1693 = smul.addr %s1692, 8
          %s1694 = scalar_lea.hbm %s5, %s1693
          %s1695 = sshll.u32 %s1685, 4
          %s1696 = int_to_ptr.vmem [resolvable:$true] %s1695
          %s1697 = sshll.u32 %s1694, 4
          %s1698 = int_to_ptr.hbm [resolvable:$true] %s1697
          %1703 = dma.vmem_to_hbm [thread:$0]  %s1696, 14336, %s1698, %s1682, 896, 896, 56
        $region64: #{tpu_custom_call.1} parent=39 // pred_fallthru
          _
      $region40: #{tpu_custom_call.1} parent=5 // pred_fallthru
        _
      %p1704 = scmp.le.s32.totalorder 2, %s19
      // Predicated region
      $region65: #{tpu_custom_call.1} parent=5 // pred_check
        %p1705 = pneg %p1704
      $region66: #{tpu_custom_call.1} parent=5 // pred_check_branch
        %1707 = sbr.rel (%p1705) target = $region68
      $region67: #{tpu_custom_call.1} parent=5 // pred_region
        %s1708 = ssub.s32 %s19, 2
        // Predicated region
        $region69: #{tpu_custom_call.1} parent=67 // pred_check
          %p1709 = pneg %p158
        $region70: #{tpu_custom_call.1} parent=67 // pred_check_branch
          %1711 = sbr.rel (%p1709) target = $region72
        $region71: #{tpu_custom_call.1} parent=67 // pred_region
          %s1712 = sand.u32 %s143, 1
          %s1713 = scalar_lea.sflag [#allocation4], %s1712
          %s1714 = sand.u32 %s143, 1
          %s1715 = smul.addr %s1714, 896
          %s1716 = scalar_lea.vmem [#allocation11], %s1715
          %1718 = dma.done %s1713, 14336
        $region72: #{tpu_custom_call.1} parent=67 // pred_fallthru
          _
      $region68: #{tpu_custom_call.1} parent=5 // pred_fallthru
        _
    $region6: #{tpu_custom_call.1} parent=1 // loop_footer
      %s23 = sadd.s32 1, %s19
    $region7: #{tpu_custom_call.1} parent=1 // loop_footer_branch
      %18 = sbr.rel target = $region3
    $region8: #{tpu_custom_call.1} parent=1 // loop_exit
      _
    %1719 = vsyncpa [#allocation3], 1
    %s1720 = scalar_lea.sflag [#allocation3], 1
    %1721 = vsyncpa %s1720, 1
    %1722 = vsyncpa [#allocation6], 1
    %1723 = vsyncpa [#allocation9], 1
    %1724 = vsyncpa [#allocation4], 1
    %s1725 = scalar_lea.sflag [#allocation4], 1
    %1726 = vsyncpa %s1725, 1

</llo_original>
